<compile_context>
chip_gen: v6e
topology: v6e:2x2x1
jax: 0.10.0
libtpu: 0.0.40
codegen_flags: <defaults>
</compile_context>

<pallas_src>
import functools

import jax
import jax.numpy as jnp
from jax import lax
from jax.experimental import pallas as pl
from jax.experimental.pallas import tpu as pltpu


# ----------------------------- Pallas kernel -------------------------------

def _conv3d_relu6_kernel(x_ref, w_ref, b_ref, o_ref, *, KD, sd, OD, OHW):
    # x_ref: (Dp, Cin*KH*KW, OHW)   lane-dense unfolded input for one batch elem
    # w_ref: (KD, Cout, Cin*KH*KW)  one (Cout, Cin*KH*KW) matrix per depth tap
    # b_ref: (Cout, 1)              bias, f32
    # o_ref: (Cout, OD*OHW)         all output depth slices, pixel dim on lanes
    Cout = o_ref.shape[0]

    # Bias folded into the accumulator init; hoisted out of the od loop
    # (broadcast_in_dim is not CSE'd by JAX).
    bias = jnp.broadcast_to(b_ref[...], (Cout, OHW)).astype(jnp.float32)

    # Small static trip counts (OD=8, KD=3): fully unrolled so the scheduler
    # sees all matmuls / stores and every slice offset is static.
    for od in range(OD):
        acc = bias
        for kd in range(KD):
            # (Cout, K2) @ (K2, OHW) on the MXU, f32 accumulation.
            acc = acc + jnp.dot(w_ref[kd], x_ref[od * sd + kd],
                                preferred_element_type=jnp.float32)
        # ReLU6 in f32, then a lane-dense store at a 128-aligned lane offset.
        o_ref[:, od * OHW:(od + 1) * OHW] = jnp.clip(acc, 0.0, 6.0).astype(o_ref.dtype)


# ------------------------------- wrapper ------------------------------------

@functools.partial(jax.jit, static_argnames=("stride", "padding", "compute_dtype"))
def conv3d_relu6(x, weight, bias, *, stride=(1, 1, 1), padding=(1, 1, 1),
                 compute_dtype=jnp.float32):
    """Fused Conv3d (NCDHW input, OIDHW weight) + ReLU6 via a Pallas TPU kernel."""
    N, Cin, D, H, W = x.shape
    Cout, Cin_w, KD, KH, KW = weight.shape
    assert Cin_w == Cin, "grouped conv not supported"
    sd, sh, sw = stride
    pd, ph, pw = padding
    OD = (D + 2 * pd - KD) // sd + 1
    OH = (H + 2 * ph - KH) // sh + 1
    OW = (W + 2 * pw - KW) // sw + 1
    OHW = OH * OW
    Dp = D + 2 * pd
    K2 = Cin * KH * KW

    # Conv zero-padding + wrapper-side H/W unfold to a lane-dense layout
    # (N, Dp, Cin*KH*KW, OH*OW).  Spatial stride is absorbed here, so the
    # kernel only ever does dense, aligned slab reads.
    xp = jnp.pad(x, ((0, 0), (0, 0), (pd, pd), (ph, ph), (pw, pw)))
    taps = []
    for kh in range(KH):
        for kw in range(KW):
            taps.append(xp[:, :, :,
                           kh:kh + sh * (OH - 1) + 1:sh,
                           kw:kw + sw * (OW - 1) + 1:sw])        # (N, Cin, Dp, OH, OW)
    x_unf = jnp.stack(taps, axis=2)                              # (N, Cin, KH*KW, Dp, OH, OW)
    x_unf = x_unf.transpose(0, 3, 1, 2, 4, 5).reshape(N, Dp, K2, OHW)
    x_unf = x_unf.astype(compute_dtype)

    # Weight: OIDHW -> (KD, Cout, Cin*KH*KW); K2 ordering (Cin, KH, KW) matches
    # the unfold above.  Tiny, VMEM-resident.
    wt = weight.transpose(2, 0, 1, 3, 4).reshape(KD, Cout, K2).astype(compute_dtype)
    bt = bias.astype(jnp.float32).reshape(Cout, 1)

    kernel = functools.partial(_conv3d_relu6_kernel, KD=KD, sd=sd, OD=OD, OHW=OHW)

    out = pl.pallas_call(
        kernel,
        out_shape=jax.ShapeDtypeStruct((N, Cout, OD * OHW), jnp.float32),
        grid_spec=pltpu.PrefetchScalarGridSpec(
            num_scalar_prefetch=0,
            grid=(N,),
            in_specs=[
                # Whole unfolded slab for batch n (~400 KiB f32 at test shape).
                pl.BlockSpec((None, Dp, K2, OHW), lambda n: (n, 0, 0, 0)),
                pl.BlockSpec((KD, Cout, K2), lambda n: (0, 0, 0)),
                pl.BlockSpec((Cout, 1), lambda n: (0, 0)),
            ],
            # All OD slices for batch n in one block (64 KiB f32).
            out_specs=pl.BlockSpec((None, Cout, OD * OHW), lambda n: (n, 0, 0)),
        ),
        compiler_params=pltpu.CompilerParams(
            dimension_semantics=("parallel",),
            vmem_limit_bytes=32 * 1024 * 1024,
        ),
    )(x_unf, wt, bt)

    # (N, Cout, OD*OHW) -> NCDHW: metadata-only reshape, no XLA transpose.
    return out.reshape(N, Cout, OD, OH, OW)


# ------------------------------- reference ----------------------------------

def conv3d_relu6_ref(x, weight, bias, *, stride=(1, 1, 1), padding=(1, 1, 1)):
    y = lax.conv_general_dilated(
        x, weight,
        window_strides=stride,
        padding=[(p, p) for p in padding],
        dimension_numbers=("NCDHW", "OIDHW", "NCDHW"),
    )
    y = y + bias.reshape(1, -1, 1, 1, 1)
    return jnp.clip(y, 0.0, 6.0)


# --------------------------------- main --------------------------------------

if __name__ == "__main__":
    key = jax.random.PRNGKey(0)
    kx, kw_, kb = jax.random.split(key, 3)

    # Small shapes consistent with Conv3d(4, 8, kernel_size=3, padding=1) + ReLU6.
    N, Cin, D, H, W = 2, 4, 8, 16, 16
    Cout, KD, KH, KW = 8, 3, 3, 3
    stride, padding = (1, 1, 1), (1, 1, 1)

    x = jax.random.normal(kx, (N, Cin, D, H, W), dtype=jnp.float32)
    fan_in = Cin * KD * KH * KW
    bound = 1.0 / (fan_in ** 0.5)
    weight = jax.random.uniform(kw_, (Cout, Cin, KD, KH, KW), jnp.float32, -bound, bound)
    bias = jax.random.uniform(kb, (Cout,), jnp.float32, -bound, bound)

    # --- f32 path (exact module semantics; preferred on v5e) ---
    out = conv3d_relu6(x, weight, bias, stride=stride, padding=padding)
    out = jax.block_until_ready(out)
    ref = conv3d_relu6_ref(x, weight, bias, stride=stride, padding=padding)
    assert out.shape == (N, Cout, D, H, W), out.shape
    err = float(jnp.max(jnp.abs(out - ref)))
    assert err < 1e-4, f"f32 max err {err}"

    # --- bf16 MXU-input path (v6e/v7x option), f32 accumulation, f32 output ---
    out_bf = conv3d_relu6(x, weight, bias, stride=stride, padding=padding,
                          compute_dtype=jnp.bfloat16)
    out_bf = jax.block_until_ready(out_bf)
    ref_bf = conv3d_relu6_ref(
        x.astype(jnp.bfloat16).astype(jnp.float32),
        weight.astype(jnp.bfloat16).astype(jnp.float32),
        bias, stride=stride, padding=padding)
    err_bf = float(jnp.max(jnp.abs(out_bf - ref_bf)))
    assert err_bf < 5e-3, f"bf16 max err {err_bf}"

    print("KERNEL_OK")
</pallas_src>

<mosaic_0001>
module attributes {stable_mosaic.version = 11 : i64} {
  func.func @_conv3d_relu6_kernel(%arg0: i32, %arg1: memref<1x10x36x256xf32, #tpu.memory_space<vmem>>, %arg2: memref<3x8x36xf32, #tpu.memory_space<vmem>>, %arg3: memref<8x1xf32, #tpu.memory_space<vmem>>, %arg4: memref<1x8x2048xf32, #tpu.memory_space<vmem>>) attributes {dimension_semantics = [#tpu.dimension_semantics<parallel>], iteration_bounds = array<i64: 2>, scalar_prefetch = 0 : i64, scratch_operands = 0 : i64, tpu.core_type = #tpu.core_type<tc>, window_params = [{transform_indices = @transform_0, window_bounds = array<i64: 1, 10, 36, 256>}, {pipeline_mode = #tpu.pipeline_mode<synchronous>, transform_indices = @transform_1, window_bounds = array<i64: 3, 8, 36>}, {pipeline_mode = #tpu.pipeline_mode<synchronous>, transform_indices = @transform_2, window_bounds = array<i64: 8, 1>}, {transform_indices = @transform_3, window_bounds = array<i64: 1, 8, 2048>}]} {
    %c0 = arith.constant 0 : index
    %c0_0 = arith.constant 0 : index
    %0 = vector.load %arg3[%c0, %c0_0] : memref<8x1xf32, #tpu.memory_space<vmem>>, vector<8x1xf32>
    %1 = vector.shape_cast %0 : vector<8x1xf32> to vector<8x1xf32>
    %2 = vector.broadcast %1 : vector<8x1xf32> to vector<8x256xf32>
    %c0_1 = arith.constant 0 : index
    %c0_2 = arith.constant 0 : index
    %c0_3 = arith.constant 0 : index
    %3 = vector.load %arg2[%c0_1, %c0_2, %c0_3] : memref<3x8x36xf32, #tpu.memory_space<vmem>>, vector<1x8x36xf32>
    %4 = vector.shape_cast %3 : vector<1x8x36xf32> to vector<8x36xf32>
    %c0_4 = arith.constant 0 : index
    %c0_5 = arith.constant 0 : index
    %c0_6 = arith.constant 0 : index
    %c0_7 = arith.constant 0 : index
    %5 = vector.load %arg1[%c0_4, %c0_5, %c0_6, %c0_7] : memref<1x10x36x256xf32, #tpu.memory_space<vmem>>, vector<1x1x36x256xf32>
    %6 = vector.shape_cast %5 : vector<1x1x36x256xf32> to vector<36x256xf32>
    %cst = arith.constant dense<0.000000e+00> : vector<8x256xf32>
    %7 = tpu.matmul %4, %6, %cst {dimension_numbers = #tpu.dot_dimension_numbers<[1], [0], [0], [1], [0, 0, 1, 1], [], []>} : vector<8x36xf32>, vector<36x256xf32>, vector<8x256xf32> -> vector<8x256xf32>
    %8 = arith.addf %2, %7 : vector<8x256xf32>
    %c1 = arith.constant 1 : index
    %c0_8 = arith.constant 0 : index
    %c0_9 = arith.constant 0 : index
    %9 = vector.load %arg2[%c1, %c0_8, %c0_9] : memref<3x8x36xf32, #tpu.memory_space<vmem>>, vector<1x8x36xf32>
    %10 = vector.shape_cast %9 : vector<1x8x36xf32> to vector<8x36xf32>
    %c0_10 = arith.constant 0 : index
    %c1_11 = arith.constant 1 : index
    %c0_12 = arith.constant 0 : index
    %c0_13 = arith.constant 0 : index
    %11 = vector.load %arg1[%c0_10, %c1_11, %c0_12, %c0_13] : memref<1x10x36x256xf32, #tpu.memory_space<vmem>>, vector<1x1x36x256xf32>
    %12 = vector.shape_cast %11 : vector<1x1x36x256xf32> to vector<36x256xf32>
    %cst_14 = arith.constant dense<0.000000e+00> : vector<8x256xf32>
    %13 = tpu.matmul %10, %12, %cst_14 {dimension_numbers = #tpu.dot_dimension_numbers<[1], [0], [0], [1], [0, 0, 1, 1], [], []>} : vector<8x36xf32>, vector<36x256xf32>, vector<8x256xf32> -> vector<8x256xf32>
    %14 = arith.addf %8, %13 : vector<8x256xf32>
    %c2 = arith.constant 2 : index
    %c0_15 = arith.constant 0 : index
    %c0_16 = arith.constant 0 : index
    %15 = vector.load %arg2[%c2, %c0_15, %c0_16] : memref<3x8x36xf32, #tpu.memory_space<vmem>>, vector<1x8x36xf32>
    %16 = vector.shape_cast %15 : vector<1x8x36xf32> to vector<8x36xf32>
    %c0_17 = arith.constant 0 : index
    %c2_18 = arith.constant 2 : index
    %c0_19 = arith.constant 0 : index
    %c0_20 = arith.constant 0 : index
    %17 = vector.load %arg1[%c0_17, %c2_18, %c0_19, %c0_20] : memref<1x10x36x256xf32, #tpu.memory_space<vmem>>, vector<1x1x36x256xf32>
    %18 = vector.shape_cast %17 : vector<1x1x36x256xf32> to vector<36x256xf32>
    %cst_21 = arith.constant dense<0.000000e+00> : vector<8x256xf32>
    %19 = tpu.matmul %16, %18, %cst_21 {dimension_numbers = #tpu.dot_dimension_numbers<[1], [0], [0], [1], [0, 0, 1, 1], [], []>} : vector<8x36xf32>, vector<36x256xf32>, vector<8x256xf32> -> vector<8x256xf32>
    %20 = arith.addf %14, %19 : vector<8x256xf32>
    %cst_22 = arith.constant 0.000000e+00 : f32
    %cst_23 = arith.constant 6.000000e+00 : f32
    %21 = vector.broadcast %cst_22 : f32 to vector<8x256xf32>
    %22 = arith.maximumf %21, %20 : vector<8x256xf32>
    %23 = vector.broadcast %cst_23 : f32 to vector<8x256xf32>
    %24 = arith.minimumf %23, %22 : vector<8x256xf32>
    %c0_24 = arith.constant 0 : index
    %c0_25 = arith.constant 0 : index
    %c0_26 = arith.constant 0 : index
    %25 = vector.load %arg4[%c0_24, %c0_25, %c0_26] : memref<1x8x2048xf32, #tpu.memory_space<vmem>>, vector<1x8x256xf32>
    %26 = vector.shape_cast %25 : vector<1x8x256xf32> to vector<8x256xf32>
    %27 = vector.shape_cast %24 : vector<8x256xf32> to vector<1x8x256xf32>
    tpu.vector_store %arg4[%c0_24, %c0_25, %c0_26], %27 {strides = array<i32>} : memref<1x8x2048xf32, #tpu.memory_space<vmem>>, vector<1x8x256xf32>,
    %c0_27 = arith.constant 0 : index
    %c0_28 = arith.constant 0 : index
    %c0_29 = arith.constant 0 : index
    %28 = vector.load %arg2[%c0_27, %c0_28, %c0_29] : memref<3x8x36xf32, #tpu.memory_space<vmem>>, vector<1x8x36xf32>
    %29 = vector.shape_cast %28 : vector<1x8x36xf32> to vector<8x36xf32>
    %c0_30 = arith.constant 0 : index
    %c1_31 = arith.constant 1 : index
    %c0_32 = arith.constant 0 : index
    %c0_33 = arith.constant 0 : index
    %30 = vector.load %arg1[%c0_30, %c1_31, %c0_32, %c0_33] : memref<1x10x36x256xf32, #tpu.memory_space<vmem>>, vector<1x1x36x256xf32>
    %31 = vector.shape_cast %30 : vector<1x1x36x256xf32> to vector<36x256xf32>
    %cst_34 = arith.constant dense<0.000000e+00> : vector<8x256xf32>
    %32 = tpu.matmul %29, %31, %cst_34 {dimension_numbers = #tpu.dot_dimension_numbers<[1], [0], [0], [1], [0, 0, 1, 1], [], []>} : vector<8x36xf32>, vector<36x256xf32>, vector<8x256xf32> -> vector<8x256xf32>
    %33 = arith.addf %2, %32 : vector<8x256xf32>
    %c1_35 = arith.constant 1 : index
    %c0_36 = arith.constant 0 : index
    %c0_37 = arith.constant 0 : index
    %34 = vector.load %arg2[%c1_35, %c0_36, %c0_37] : memref<3x8x36xf32, #tpu.memory_space<vmem>>, vector<1x8x36xf32>
    %35 = vector.shape_cast %34 : vector<1x8x36xf32> to vector<8x36xf32>
    %c0_38 = arith.constant 0 : index
    %c2_39 = arith.constant 2 : index
    %c0_40 = arith.constant 0 : index
    %c0_41 = arith.constant 0 : index
    %36 = vector.load %arg1[%c0_38, %c2_39, %c0_40, %c0_41] : memref<1x10x36x256xf32, #tpu.memory_space<vmem>>, vector<1x1x36x256xf32>
    %37 = vector.shape_cast %36 : vector<1x1x36x256xf32> to vector<36x256xf32>
    %cst_42 = arith.constant dense<0.000000e+00> : vector<8x256xf32>
    %38 = tpu.matmul %35, %37, %cst_42 {dimension_numbers = #tpu.dot_dimension_numbers<[1], [0], [0], [1], [0, 0, 1, 1], [], []>} : vector<8x36xf32>, vector<36x256xf32>, vector<8x256xf32> -> vector<8x256xf32>
    %39 = arith.addf %33, %38 : vector<8x256xf32>
    %c2_43 = arith.constant 2 : index
    %c0_44 = arith.constant 0 : index
    %c0_45 = arith.constant 0 : index
    %40 = vector.load %arg2[%c2_43, %c0_44, %c0_45] : memref<3x8x36xf32, #tpu.memory_space<vmem>>, vector<1x8x36xf32>
    %41 = vector.shape_cast %40 : vector<1x8x36xf32> to vector<8x36xf32>
    %c0_46 = arith.constant 0 : index
    %c3 = arith.constant 3 : index
    %c0_47 = arith.constant 0 : index
    %c0_48 = arith.constant 0 : index
    %42 = vector.load %arg1[%c0_46, %c3, %c0_47, %c0_48] : memref<1x10x36x256xf32, #tpu.memory_space<vmem>>, vector<1x1x36x256xf32>
    %43 = vector.shape_cast %42 : vector<1x1x36x256xf32> to vector<36x256xf32>
    %cst_49 = arith.constant dense<0.000000e+00> : vector<8x256xf32>
    %44 = tpu.matmul %41, %43, %cst_49 {dimension_numbers = #tpu.dot_dimension_numbers<[1], [0], [0], [1], [0, 0, 1, 1], [], []>} : vector<8x36xf32>, vector<36x256xf32>, vector<8x256xf32> -> vector<8x256xf32>
    %45 = arith.addf %39, %44 : vector<8x256xf32>
    %cst_50 = arith.constant 0.000000e+00 : f32
    %cst_51 = arith.constant 6.000000e+00 : f32
    %46 = vector.broadcast %cst_50 : f32 to vector<8x256xf32>
    %47 = arith.maximumf %46, %45 : vector<8x256xf32>
    %48 = vector.broadcast %cst_51 : f32 to vector<8x256xf32>
    %49 = arith.minimumf %48, %47 : vector<8x256xf32>
    %c0_52 = arith.constant 0 : index
    %c0_53 = arith.constant 0 : index
    %c256 = arith.constant 256 : index
    %50 = vector.load %arg4[%c0_52, %c0_53, %c256] : memref<1x8x2048xf32, #tpu.memory_space<vmem>>, vector<1x8x256xf32>
    %51 = vector.shape_cast %50 : vector<1x8x256xf32> to vector<8x256xf32>
    %52 = vector.shape_cast %49 : vector<8x256xf32> to vector<1x8x256xf32>
    tpu.vector_store %arg4[%c0_52, %c0_53, %c256], %52 {strides = array<i32>} : memref<1x8x2048xf32, #tpu.memory_space<vmem>>, vector<1x8x256xf32>,
    %c0_54 = arith.constant 0 : index
    %c0_55 = arith.constant 0 : index
    %c0_56 = arith.constant 0 : index
    %53 = vector.load %arg2[%c0_54, %c0_55, %c0_56] : memref<3x8x36xf32, #tpu.memory_space<vmem>>, vector<1x8x36xf32>
    %54 = vector.shape_cast %53 : vector<1x8x36xf32> to vector<8x36xf32>
    %c0_57 = arith.constant 0 : index
    %c2_58 = arith.constant 2 : index
    %c0_59 = arith.constant 0 : index
    %c0_60 = arith.constant 0 : index
    %55 = vector.load %arg1[%c0_57, %c2_58, %c0_59, %c0_60] : memref<1x10x36x256xf32, #tpu.memory_space<vmem>>, vector<1x1x36x256xf32>
    %56 = vector.shape_cast %55 : vector<1x1x36x256xf32> to vector<36x256xf32>
    %cst_61 = arith.constant dense<0.000000e+00> : vector<8x256xf32>
    %57 = tpu.matmul %54, %56, %cst_61 {dimension_numbers = #tpu.dot_dimension_numbers<[1], [0], [0], [1], [0, 0, 1, 1], [], []>} : vector<8x36xf32>, vector<36x256xf32>, vector<8x256xf32> -> vector<8x256xf32>
    %58 = arith.addf %2, %57 : vector<8x256xf32>
    %c1_62 = arith.constant 1 : index
    %c0_63 = arith.constant 0 : index
    %c0_64 = arith.constant 0 : index
    %59 = vector.load %arg2[%c1_62, %c0_63, %c0_64] : memref<3x8x36xf32, #tpu.memory_space<vmem>>, vector<1x8x36xf32>
    %60 = vector.shape_cast %59 : vector<1x8x36xf32> to vector<8x36xf32>
    %c0_65 = arith.constant 0 : index
    %c3_66 = arith.constant 3 : index
    %c0_67 = arith.constant 0 : index
    %c0_68 = arith.constant 0 : index
    %61 = vector.load %arg1[%c0_65, %c3_66, %c0_67, %c0_68] : memref<1x10x36x256xf32, #tpu.memory_space<vmem>>, vector<1x1x36x256xf32>
    %62 = vector.shape_cast %61 : vector<1x1x36x256xf32> to vector<36x256xf32>
    %cst_69 = arith.constant dense<0.000000e+00> : vector<8x256xf32>
    %63 = tpu.matmul %60, %62, %cst_69 {dimension_numbers = #tpu.dot_dimension_numbers<[1], [0], [0], [1], [0, 0, 1, 1], [], []>} : vector<8x36xf32>, vector<36x256xf32>, vector<8x256xf32> -> vector<8x256xf32>
    %64 = arith.addf %58, %63 : vector<8x256xf32>
    %c2_70 = arith.constant 2 : index
    %c0_71 = arith.constant 0 : index
    %c0_72 = arith.constant 0 : index
    %65 = vector.load %arg2[%c2_70, %c0_71, %c0_72] : memref<3x8x36xf32, #tpu.memory_space<vmem>>, vector<1x8x36xf32>
    %66 = vector.shape_cast %65 : vector<1x8x36xf32> to vector<8x36xf32>
    %c0_73 = arith.constant 0 : index
    %c4 = arith.constant 4 : index
    %c0_74 = arith.constant 0 : index
    %c0_75 = arith.constant 0 : index
    %67 = vector.load %arg1[%c0_73, %c4, %c0_74, %c0_75] : memref<1x10x36x256xf32, #tpu.memory_space<vmem>>, vector<1x1x36x256xf32>
    %68 = vector.shape_cast %67 : vector<1x1x36x256xf32> to vector<36x256xf32>
    %cst_76 = arith.constant dense<0.000000e+00> : vector<8x256xf32>
    %69 = tpu.matmul %66, %68, %cst_76 {dimension_numbers = #tpu.dot_dimension_numbers<[1], [0], [0], [1], [0, 0, 1, 1], [], []>} : vector<8x36xf32>, vector<36x256xf32>, vector<8x256xf32> -> vector<8x256xf32>
    %70 = arith.addf %64, %69 : vector<8x256xf32>
    %cst_77 = arith.constant 0.000000e+00 : f32
    %cst_78 = arith.constant 6.000000e+00 : f32
    %71 = vector.broadcast %cst_77 : f32 to vector<8x256xf32>
    %72 = arith.maximumf %71, %70 : vector<8x256xf32>
    %73 = vector.broadcast %cst_78 : f32 to vector<8x256xf32>
    %74 = arith.minimumf %73, %72 : vector<8x256xf32>
    %c0_79 = arith.constant 0 : index
    %c0_80 = arith.constant 0 : index
    %c512 = arith.constant 512 : index
    %75 = vector.load %arg4[%c0_79, %c0_80, %c512] : memref<1x8x2048xf32, #tpu.memory_space<vmem>>, vector<1x8x256xf32>
    %76 = vector.shape_cast %75 : vector<1x8x256xf32> to vector<8x256xf32>
    %77 = vector.shape_cast %74 : vector<8x256xf32> to vector<1x8x256xf32>
    tpu.vector_store %arg4[%c0_79, %c0_80, %c512], %77 {strides = array<i32>} : memref<1x8x2048xf32, #tpu.memory_space<vmem>>, vector<1x8x256xf32>,
    %c0_81 = arith.constant 0 : index
    %c0_82 = arith.constant 0 : index
    %c0_83 = arith.constant 0 : index
    %78 = vector.load %arg2[%c0_81, %c0_82, %c0_83] : memref<3x8x36xf32, #tpu.memory_space<vmem>>, vector<1x8x36xf32>
    %79 = vector.shape_cast %78 : vector<1x8x36xf32> to vector<8x36xf32>
    %c0_84 = arith.constant 0 : index
    %c3_85 = arith.constant 3 : index
    %c0_86 = arith.constant 0 : index
    %c0_87 = arith.constant 0 : index
    %80 = vector.load %arg1[%c0_84, %c3_85, %c0_86, %c0_87] : memref<1x10x36x256xf32, #tpu.memory_space<vmem>>, vector<1x1x36x256xf32>
    %81 = vector.shape_cast %80 : vector<1x1x36x256xf32> to vector<36x256xf32>
    %cst_88 = arith.constant dense<0.000000e+00> : vector<8x256xf32>
    %82 = tpu.matmul %79, %81, %cst_88 {dimension_numbers = #tpu.dot_dimension_numbers<[1], [0], [0], [1], [0, 0, 1, 1], [], []>} : vector<8x36xf32>, vector<36x256xf32>, vector<8x256xf32> -> vector<8x256xf32>
    %83 = arith.addf %2, %82 : vector<8x256xf32>
    %c1_89 = arith.constant 1 : index
    %c0_90 = arith.constant 0 : index
    %c0_91 = arith.constant 0 : index
    %84 = vector.load %arg2[%c1_89, %c0_90, %c0_91] : memref<3x8x36xf32, #tpu.memory_space<vmem>>, vector<1x8x36xf32>
    %85 = vector.shape_cast %84 : vector<1x8x36xf32> to vector<8x36xf32>
    %c0_92 = arith.constant 0 : index
    %c4_93 = arith.constant 4 : index
    %c0_94 = arith.constant 0 : index
    %c0_95 = arith.constant 0 : index
    %86 = vector.load %arg1[%c0_92, %c4_93, %c0_94, %c0_95] : memref<1x10x36x256xf32, #tpu.memory_space<vmem>>, vector<1x1x36x256xf32>
    %87 = vector.shape_cast %86 : vector<1x1x36x256xf32> to vector<36x256xf32>
    %cst_96 = arith.constant dense<0.000000e+00> : vector<8x256xf32>
    %88 = tpu.matmul %85, %87, %cst_96 {dimension_numbers = #tpu.dot_dimension_numbers<[1], [0], [0], [1], [0, 0, 1, 1], [], []>} : vector<8x36xf32>, vector<36x256xf32>, vector<8x256xf32> -> vector<8x256xf32>
    %89 = arith.addf %83, %88 : vector<8x256xf32>
    %c2_97 = arith.constant 2 : index
    %c0_98 = arith.constant 0 : index
    %c0_99 = arith.constant 0 : index
    %90 = vector.load %arg2[%c2_97, %c0_98, %c0_99] : memref<3x8x36xf32, #tpu.memory_space<vmem>>, vector<1x8x36xf32>
    %91 = vector.shape_cast %90 : vector<1x8x36xf32> to vector<8x36xf32>
    %c0_100 = arith.constant 0 : index
    %c5 = arith.constant 5 : index
    %c0_101 = arith.constant 0 : index
    %c0_102 = arith.constant 0 : index
    %92 = vector.load %arg1[%c0_100, %c5, %c0_101, %c0_102] : memref<1x10x36x256xf32, #tpu.memory_space<vmem>>, vector<1x1x36x256xf32>
    %93 = vector.shape_cast %92 : vector<1x1x36x256xf32> to vector<36x256xf32>
    %cst_103 = arith.constant dense<0.000000e+00> : vector<8x256xf32>
    %94 = tpu.matmul %91, %93, %cst_103 {dimension_numbers = #tpu.dot_dimension_numbers<[1], [0], [0], [1], [0, 0, 1, 1], [], []>} : vector<8x36xf32>, vector<36x256xf32>, vector<8x256xf32> -> vector<8x256xf32>
    %95 = arith.addf %89, %94 : vector<8x256xf32>
    %cst_104 = arith.constant 0.000000e+00 : f32
    %cst_105 = arith.constant 6.000000e+00 : f32
    %96 = vector.broadcast %cst_104 : f32 to vector<8x256xf32>
    %97 = arith.maximumf %96, %95 : vector<8x256xf32>
    %98 = vector.broadcast %cst_105 : f32 to vector<8x256xf32>
    %99 = arith.minimumf %98, %97 : vector<8x256xf32>
    %c0_106 = arith.constant 0 : index
    %c0_107 = arith.constant 0 : index
    %c768 = arith.constant 768 : index
    %100 = vector.load %arg4[%c0_106, %c0_107, %c768] : memref<1x8x2048xf32, #tpu.memory_space<vmem>>, vector<1x8x256xf32>
    %101 = vector.shape_cast %100 : vector<1x8x256xf32> to vector<8x256xf32>
    %102 = vector.shape_cast %99 : vector<8x256xf32> to vector<1x8x256xf32>
    tpu.vector_store %arg4[%c0_106, %c0_107, %c768], %102 {strides = array<i32>} : memref<1x8x2048xf32, #tpu.memory_space<vmem>>, vector<1x8x256xf32>,
    %c0_108 = arith.constant 0 : index
    %c0_109 = arith.constant 0 : index
    %c0_110 = arith.constant 0 : index
    %103 = vector.load %arg2[%c0_108, %c0_109, %c0_110] : memref<3x8x36xf32, #tpu.memory_space<vmem>>, vector<1x8x36xf32>
    %104 = vector.shape_cast %103 : vector<1x8x36xf32> to vector<8x36xf32>
    %c0_111 = arith.constant 0 : index
    %c4_112 = arith.constant 4 : index
    %c0_113 = arith.constant 0 : index
    %c0_114 = arith.constant 0 : index
    %105 = vector.load %arg1[%c0_111, %c4_112, %c0_113, %c0_114] : memref<1x10x36x256xf32, #tpu.memory_space<vmem>>, vector<1x1x36x256xf32>
    %106 = vector.shape_cast %105 : vector<1x1x36x256xf32> to vector<36x256xf32>
    %cst_115 = arith.constant dense<0.000000e+00> : vector<8x256xf32>
    %107 = tpu.matmul %104, %106, %cst_115 {dimension_numbers = #tpu.dot_dimension_numbers<[1], [0], [0], [1], [0, 0, 1, 1], [], []>} : vector<8x36xf32>, vector<36x256xf32>, vector<8x256xf32> -> vector<8x256xf32>
    %108 = arith.addf %2, %107 : vector<8x256xf32>
    %c1_116 = arith.constant 1 : index
    %c0_117 = arith.constant 0 : index
    %c0_118 = arith.constant 0 : index
    %109 = vector.load %arg2[%c1_116, %c0_117, %c0_118] : memref<3x8x36xf32, #tpu.memory_space<vmem>>, vector<1x8x36xf32>
    %110 = vector.shape_cast %109 : vector<1x8x36xf32> to vector<8x36xf32>
    %c0_119 = arith.constant 0 : index
    %c5_120 = arith.constant 5 : index
    %c0_121 = arith.constant 0 : index
    %c0_122 = arith.constant 0 : index
    %111 = vector.load %arg1[%c0_119, %c5_120, %c0_121, %c0_122] : memref<1x10x36x256xf32, #tpu.memory_space<vmem>>, vector<1x1x36x256xf32>
    %112 = vector.shape_cast %111 : vector<1x1x36x256xf32> to vector<36x256xf32>
    %cst_123 = arith.constant dense<0.000000e+00> : vector<8x256xf32>
    %113 = tpu.matmul %110, %112, %cst_123 {dimension_numbers = #tpu.dot_dimension_numbers<[1], [0], [0], [1], [0, 0, 1, 1], [], []>} : vector<8x36xf32>, vector<36x256xf32>, vector<8x256xf32> -> vector<8x256xf32>
    %114 = arith.addf %108, %113 : vector<8x256xf32>
    %c2_124 = arith.constant 2 : index
    %c0_125 = arith.constant 0 : index
    %c0_126 = arith.constant 0 : index
    %115 = vector.load %arg2[%c2_124, %c0_125, %c0_126] : memref<3x8x36xf32, #tpu.memory_space<vmem>>, vector<1x8x36xf32>
    %116 = vector.shape_cast %115 : vector<1x8x36xf32> to vector<8x36xf32>
    %c0_127 = arith.constant 0 : index
    %c6 = arith.constant 6 : index
    %c0_128 = arith.constant 0 : index
    %c0_129 = arith.constant 0 : index
    %117 = vector.load %arg1[%c0_127, %c6, %c0_128, %c0_129] : memref<1x10x36x256xf32, #tpu.memory_space<vmem>>, vector<1x1x36x256xf32>
    %118 = vector.shape_cast %117 : vector<1x1x36x256xf32> to vector<36x256xf32>
    %cst_130 = arith.constant dense<0.000000e+00> : vector<8x256xf32>
    %119 = tpu.matmul %116, %118, %cst_130 {dimension_numbers = #tpu.dot_dimension_numbers<[1], [0], [0], [1], [0, 0, 1, 1], [], []>} : vector<8x36xf32>, vector<36x256xf32>, vector<8x256xf32> -> vector<8x256xf32>
    %120 = arith.addf %114, %119 : vector<8x256xf32>
    %cst_131 = arith.constant 0.000000e+00 : f32
    %cst_132 = arith.constant 6.000000e+00 : f32
    %121 = vector.broadcast %cst_131 : f32 to vector<8x256xf32>
    %122 = arith.maximumf %121, %120 : vector<8x256xf32>
    %123 = vector.broadcast %cst_132 : f32 to vector<8x256xf32>
    %124 = arith.minimumf %123, %122 : vector<8x256xf32>
    %c0_133 = arith.constant 0 : index
    %c0_134 = arith.constant 0 : index
    %c1024 = arith.constant 1024 : index
    %125 = vector.load %arg4[%c0_133, %c0_134, %c1024] : memref<1x8x2048xf32, #tpu.memory_space<vmem>>, vector<1x8x256xf32>
    %126 = vector.shape_cast %125 : vector<1x8x256xf32> to vector<8x256xf32>
    %127 = vector.shape_cast %124 : vector<8x256xf32> to vector<1x8x256xf32>
    tpu.vector_store %arg4[%c0_133, %c0_134, %c1024], %127 {strides = array<i32>} : memref<1x8x2048xf32, #tpu.memory_space<vmem>>, vector<1x8x256xf32>,
    %c0_135 = arith.constant 0 : index
    %c0_136 = arith.constant 0 : index
    %c0_137 = arith.constant 0 : index
    %128 = vector.load %arg2[%c0_135, %c0_136, %c0_137] : memref<3x8x36xf32, #tpu.memory_space<vmem>>, vector<1x8x36xf32>
    %129 = vector.shape_cast %128 : vector<1x8x36xf32> to vector<8x36xf32>
    %c0_138 = arith.constant 0 : index
    %c5_139 = arith.constant 5 : index
    %c0_140 = arith.constant 0 : index
    %c0_141 = arith.constant 0 : index
    %130 = vector.load %arg1[%c0_138, %c5_139, %c0_140, %c0_141] : memref<1x10x36x256xf32, #tpu.memory_space<vmem>>, vector<1x1x36x256xf32>
    %131 = vector.shape_cast %130 : vector<1x1x36x256xf32> to vector<36x256xf32>
    %cst_142 = arith.constant dense<0.000000e+00> : vector<8x256xf32>
    %132 = tpu.matmul %129, %131, %cst_142 {dimension_numbers = #tpu.dot_dimension_numbers<[1], [0], [0], [1], [0, 0, 1, 1], [], []>} : vector<8x36xf32>, vector<36x256xf32>, vector<8x256xf32> -> vector<8x256xf32>
    %133 = arith.addf %2, %132 : vector<8x256xf32>
    %c1_143 = arith.constant 1 : index
    %c0_144 = arith.constant 0 : index
    %c0_145 = arith.constant 0 : index
    %134 = vector.load %arg2[%c1_143, %c0_144, %c0_145] : memref<3x8x36xf32, #tpu.memory_space<vmem>>, vector<1x8x36xf32>
    %135 = vector.shape_cast %134 : vector<1x8x36xf32> to vector<8x36xf32>
    %c0_146 = arith.constant 0 : index
    %c6_147 = arith.constant 6 : index
    %c0_148 = arith.constant 0 : index
    %c0_149 = arith.constant 0 : index
    %136 = vector.load %arg1[%c0_146, %c6_147, %c0_148, %c0_149] : memref<1x10x36x256xf32, #tpu.memory_space<vmem>>, vector<1x1x36x256xf32>
    %137 = vector.shape_cast %136 : vector<1x1x36x256xf32> to vector<36x256xf32>
    %cst_150 = arith.constant dense<0.000000e+00> : vector<8x256xf32>
    %138 = tpu.matmul %135, %137, %cst_150 {dimension_numbers = #tpu.dot_dimension_numbers<[1], [0], [0], [1], [0, 0, 1, 1], [], []>} : vector<8x36xf32>, vector<36x256xf32>, vector<8x256xf32> -> vector<8x256xf32>
    %139 = arith.addf %133, %138 : vector<8x256xf32>
    %c2_151 = arith.constant 2 : index
    %c0_152 = arith.constant 0 : index
    %c0_153 = arith.constant 0 : index
    %140 = vector.load %arg2[%c2_151, %c0_152, %c0_153] : memref<3x8x36xf32, #tpu.memory_space<vmem>>, vector<1x8x36xf32>
    %141 = vector.shape_cast %140 : vector<1x8x36xf32> to vector<8x36xf32>
    %c0_154 = arith.constant 0 : index
    %c7 = arith.constant 7 : index
    %c0_155 = arith.constant 0 : index
    %c0_156 = arith.constant 0 : index
    %142 = vector.load %arg1[%c0_154, %c7, %c0_155, %c0_156] : memref<1x10x36x256xf32, #tpu.memory_space<vmem>>, vector<1x1x36x256xf32>
    %143 = vector.shape_cast %142 : vector<1x1x36x256xf32> to vector<36x256xf32>
    %cst_157 = arith.constant dense<0.000000e+00> : vector<8x256xf32>
    %144 = tpu.matmul %141, %143, %cst_157 {dimension_numbers = #tpu.dot_dimension_numbers<[1], [0], [0], [1], [0, 0, 1, 1], [], []>} : vector<8x36xf32>, vector<36x256xf32>, vector<8x256xf32> -> vector<8x256xf32>
    %145 = arith.addf %139, %144 : vector<8x256xf32>
    %cst_158 = arith.constant 0.000000e+00 : f32
    %cst_159 = arith.constant 6.000000e+00 : f32
    %146 = vector.broadcast %cst_158 : f32 to vector<8x256xf32>
    %147 = arith.maximumf %146, %145 : vector<8x256xf32>
    %148 = vector.broadcast %cst_159 : f32 to vector<8x256xf32>
    %149 = arith.minimumf %148, %147 : vector<8x256xf32>
    %c0_160 = arith.constant 0 : index
    %c0_161 = arith.constant 0 : index
    %c1280 = arith.constant 1280 : index
    %150 = vector.load %arg4[%c0_160, %c0_161, %c1280] : memref<1x8x2048xf32, #tpu.memory_space<vmem>>, vector<1x8x256xf32>
    %151 = vector.shape_cast %150 : vector<1x8x256xf32> to vector<8x256xf32>
    %152 = vector.shape_cast %149 : vector<8x256xf32> to vector<1x8x256xf32>
    tpu.vector_store %arg4[%c0_160, %c0_161, %c1280], %152 {strides = array<i32>} : memref<1x8x2048xf32, #tpu.memory_space<vmem>>, vector<1x8x256xf32>,
    %c0_162 = arith.constant 0 : index
    %c0_163 = arith.constant 0 : index
    %c0_164 = arith.constant 0 : index
    %153 = vector.load %arg2[%c0_162, %c0_163, %c0_164] : memref<3x8x36xf32, #tpu.memory_space<vmem>>, vector<1x8x36xf32>
    %154 = vector.shape_cast %153 : vector<1x8x36xf32> to vector<8x36xf32>
    %c0_165 = arith.constant 0 : index
    %c6_166 = arith.constant 6 : index
    %c0_167 = arith.constant 0 : index
    %c0_168 = arith.constant 0 : index
    %155 = vector.load %arg1[%c0_165, %c6_166, %c0_167, %c0_168] : memref<1x10x36x256xf32, #tpu.memory_space<vmem>>, vector<1x1x36x256xf32>
    %156 = vector.shape_cast %155 : vector<1x1x36x256xf32> to vector<36x256xf32>
    %cst_169 = arith.constant dense<0.000000e+00> : vector<8x256xf32>
    %157 = tpu.matmul %154, %156, %cst_169 {dimension_numbers = #tpu.dot_dimension_numbers<[1], [0], [0], [1], [0, 0, 1, 1], [], []>} : vector<8x36xf32>, vector<36x256xf32>, vector<8x256xf32> -> vector<8x256xf32>
    %158 = arith.addf %2, %157 : vector<8x256xf32>
    %c1_170 = arith.constant 1 : index
    %c0_171 = arith.constant 0 : index
    %c0_172 = arith.constant 0 : index
    %159 = vector.load %arg2[%c1_170, %c0_171, %c0_172] : memref<3x8x36xf32, #tpu.memory_space<vmem>>, vector<1x8x36xf32>
    %160 = vector.shape_cast %159 : vector<1x8x36xf32> to vector<8x36xf32>
    %c0_173 = arith.constant 0 : index
    %c7_174 = arith.constant 7 : index
    %c0_175 = arith.constant 0 : index
    %c0_176 = arith.constant 0 : index
    %161 = vector.load %arg1[%c0_173, %c7_174, %c0_175, %c0_176] : memref<1x10x36x256xf32, #tpu.memory_space<vmem>>, vector<1x1x36x256xf32>
    %162 = vector.shape_cast %161 : vector<1x1x36x256xf32> to vector<36x256xf32>
    %cst_177 = arith.constant dense<0.000000e+00> : vector<8x256xf32>
    %163 = tpu.matmul %160, %162, %cst_177 {dimension_numbers = #tpu.dot_dimension_numbers<[1], [0], [0], [1], [0, 0, 1, 1], [], []>} : vector<8x36xf32>, vector<36x256xf32>, vector<8x256xf32> -> vector<8x256xf32>
    %164 = arith.addf %158, %163 : vector<8x256xf32>
    %c2_178 = arith.constant 2 : index
    %c0_179 = arith.constant 0 : index
    %c0_180 = arith.constant 0 : index
    %165 = vector.load %arg2[%c2_178, %c0_179, %c0_180] : memref<3x8x36xf32, #tpu.memory_space<vmem>>, vector<1x8x36xf32>
    %166 = vector.shape_cast %165 : vector<1x8x36xf32> to vector<8x36xf32>
    %c0_181 = arith.constant 0 : index
    %c8 = arith.constant 8 : index
    %c0_182 = arith.constant 0 : index
    %c0_183 = arith.constant 0 : index
    %167 = vector.load %arg1[%c0_181, %c8, %c0_182, %c0_183] : memref<1x10x36x256xf32, #tpu.memory_space<vmem>>, vector<1x1x36x256xf32>
    %168 = vector.shape_cast %167 : vector<1x1x36x256xf32> to vector<36x256xf32>
    %cst_184 = arith.constant dense<0.000000e+00> : vector<8x256xf32>
    %169 = tpu.matmul %166, %168, %cst_184 {dimension_numbers = #tpu.dot_dimension_numbers<[1], [0], [0], [1], [0, 0, 1, 1], [], []>} : vector<8x36xf32>, vector<36x256xf32>, vector<8x256xf32> -> vector<8x256xf32>
    %170 = arith.addf %164, %169 : vector<8x256xf32>
    %cst_185 = arith.constant 0.000000e+00 : f32
    %cst_186 = arith.constant 6.000000e+00 : f32
    %171 = vector.broadcast %cst_185 : f32 to vector<8x256xf32>
    %172 = arith.maximumf %171, %170 : vector<8x256xf32>
    %173 = vector.broadcast %cst_186 : f32 to vector<8x256xf32>
    %174 = arith.minimumf %173, %172 : vector<8x256xf32>
    %c0_187 = arith.constant 0 : index
    %c0_188 = arith.constant 0 : index
    %c1536 = arith.constant 1536 : index
    %175 = vector.load %arg4[%c0_187, %c0_188, %c1536] : memref<1x8x2048xf32, #tpu.memory_space<vmem>>, vector<1x8x256xf32>
    %176 = vector.shape_cast %175 : vector<1x8x256xf32> to vector<8x256xf32>
    %177 = vector.shape_cast %174 : vector<8x256xf32> to vector<1x8x256xf32>
    tpu.vector_store %arg4[%c0_187, %c0_188, %c1536], %177 {strides = array<i32>} : memref<1x8x2048xf32, #tpu.memory_space<vmem>>, vector<1x8x256xf32>,
    %c0_189 = arith.constant 0 : index
    %c0_190 = arith.constant 0 : index
    %c0_191 = arith.constant 0 : index
    %178 = vector.load %arg2[%c0_189, %c0_190, %c0_191] : memref<3x8x36xf32, #tpu.memory_space<vmem>>, vector<1x8x36xf32>
    %179 = vector.shape_cast %178 : vector<1x8x36xf32> to vector<8x36xf32>
    %c0_192 = arith.constant 0 : index
    %c7_193 = arith.constant 7 : index
    %c0_194 = arith.constant 0 : index
    %c0_195 = arith.constant 0 : index
    %180 = vector.load %arg1[%c0_192, %c7_193, %c0_194, %c0_195] : memref<1x10x36x256xf32, #tpu.memory_space<vmem>>, vector<1x1x36x256xf32>
    %181 = vector.shape_cast %180 : vector<1x1x36x256xf32> to vector<36x256xf32>
    %cst_196 = arith.constant dense<0.000000e+00> : vector<8x256xf32>
    %182 = tpu.matmul %179, %181, %cst_196 {dimension_numbers = #tpu.dot_dimension_numbers<[1], [0], [0], [1], [0, 0, 1, 1], [], []>} : vector<8x36xf32>, vector<36x256xf32>, vector<8x256xf32> -> vector<8x256xf32>
    %183 = arith.addf %2, %182 : vector<8x256xf32>
    %c1_197 = arith.constant 1 : index
    %c0_198 = arith.constant 0 : index
    %c0_199 = arith.constant 0 : index
    %184 = vector.load %arg2[%c1_197, %c0_198, %c0_199] : memref<3x8x36xf32, #tpu.memory_space<vmem>>, vector<1x8x36xf32>
    %185 = vector.shape_cast %184 : vector<1x8x36xf32> to vector<8x36xf32>
    %c0_200 = arith.constant 0 : index
    %c8_201 = arith.constant 8 : index
    %c0_202 = arith.constant 0 : index
    %c0_203 = arith.constant 0 : index
    %186 = vector.load %arg1[%c0_200, %c8_201, %c0_202, %c0_203] : memref<1x10x36x256xf32, #tpu.memory_space<vmem>>, vector<1x1x36x256xf32>
    %187 = vector.shape_cast %186 : vector<1x1x36x256xf32> to vector<36x256xf32>
    %cst_204 = arith.constant dense<0.000000e+00> : vector<8x256xf32>
    %188 = tpu.matmul %185, %187, %cst_204 {dimension_numbers = #tpu.dot_dimension_numbers<[1], [0], [0], [1], [0, 0, 1, 1], [], []>} : vector<8x36xf32>, vector<36x256xf32>, vector<8x256xf32> -> vector<8x256xf32>
    %189 = arith.addf %183, %188 : vector<8x256xf32>
    %c2_205 = arith.constant 2 : index
    %c0_206 = arith.constant 0 : index
    %c0_207 = arith.constant 0 : index
    %190 = vector.load %arg2[%c2_205, %c0_206, %c0_207] : memref<3x8x36xf32, #tpu.memory_space<vmem>>, vector<1x8x36xf32>
    %191 = vector.shape_cast %190 : vector<1x8x36xf32> to vector<8x36xf32>
    %c0_208 = arith.constant 0 : index
    %c9 = arith.constant 9 : index
    %c0_209 = arith.constant 0 : index
    %c0_210 = arith.constant 0 : index
    %192 = vector.load %arg1[%c0_208, %c9, %c0_209, %c0_210] : memref<1x10x36x256xf32, #tpu.memory_space<vmem>>, vector<1x1x36x256xf32>
    %193 = vector.shape_cast %192 : vector<1x1x36x256xf32> to vector<36x256xf32>
    %cst_211 = arith.constant dense<0.000000e+00> : vector<8x256xf32>
    %194 = tpu.matmul %191, %193, %cst_211 {dimension_numbers = #tpu.dot_dimension_numbers<[1], [0], [0], [1], [0, 0, 1, 1], [], []>} : vector<8x36xf32>, vector<36x256xf32>, vector<8x256xf32> -> vector<8x256xf32>
    %195 = arith.addf %189, %194 : vector<8x256xf32>
    %cst_212 = arith.constant 0.000000e+00 : f32
    %cst_213 = arith.constant 6.000000e+00 : f32
    %196 = vector.broadcast %cst_212 : f32 to vector<8x256xf32>
    %197 = arith.maximumf %196, %195 : vector<8x256xf32>
    %198 = vector.broadcast %cst_213 : f32 to vector<8x256xf32>
    %199 = arith.minimumf %198, %197 : vector<8x256xf32>
    %c0_214 = arith.constant 0 : index
    %c0_215 = arith.constant 0 : index
    %c1792 = arith.constant 1792 : index
    %200 = vector.load %arg4[%c0_214, %c0_215, %c1792] : memref<1x8x2048xf32, #tpu.memory_space<vmem>>, vector<1x8x256xf32>
    %201 = vector.shape_cast %200 : vector<1x8x256xf32> to vector<8x256xf32>
    %202 = vector.shape_cast %199 : vector<8x256xf32> to vector<1x8x256xf32>
    tpu.vector_store %arg4[%c0_214, %c0_215, %c1792], %202 {strides = array<i32>} : memref<1x8x2048xf32, #tpu.memory_space<vmem>>, vector<1x8x256xf32>,
    return
  }
  func.func @transform_0(%arg0: i32) -> (i32, i32, i32, i32) {
    %c0_i32 = arith.constant 0 : i32
    %c0_i32_0 = arith.constant 0 : i32
    %c0_i32_1 = arith.constant 0 : i32
    %c0_i32_2 = arith.constant 0 : i32
    return %arg0, %c0_i32, %c0_i32_0, %c0_i32_1 : i32, i32, i32, i32
  }
  func.func @transform_1(%arg0: i32) -> (i32, i32, i32) {
    %c0_i32 = arith.constant 0 : i32
    %c0_i32_0 = arith.constant 0 : i32
    %c0_i32_1 = arith.constant 0 : i32
    %c0_i32_2 = arith.constant 0 : i32
    return %c0_i32, %c0_i32_0, %c0_i32_1 : i32, i32, i32
  }
  func.func @transform_2(%arg0: i32) -> (i32, i32) {
    %c0_i32 = arith.constant 0 : i32
    %c0_i32_0 = arith.constant 0 : i32
    %c0_i32_1 = arith.constant 0 : i32
    return %c0_i32, %c0_i32_0 : i32, i32
  }
  func.func @transform_3(%arg0: i32) -> (i32, i32, i32) {
    %c0_i32 = arith.constant 0 : i32
    %c0_i32_0 = arith.constant 0 : i32
    %c0_i32_1 = arith.constant 0 : i32
    return %arg0, %c0_i32, %c0_i32_0 : i32, i32, i32
  }
}

</mosaic_0001>

<llo_original>
// kernel: conv3d_relu6.1
$region0: #{conv3d_relu6.1}
  #allocation0 [shape = 'u32[]', space=smem, size = 0x4, offset = 0x4, fixed_abs, tag = 'smem constant byte address 0x4 - core index']
  #allocation1 [shape = 'u32[144,128]{1,0:T(1,128)}', space=vmem, size = 0x12000, scoped, tag = 'internal scratch']
  %s0 = inlined_call_operand.vmem [shape: f32[2,10,36,256], index: 0, kind: input, shape index: {}]
  %s1 = inlined_call_operand.vmem [shape: f32[3,8,36], index: 1, kind: input, shape index: {}]
  %s2 = inlined_call_operand.vmem [shape: f32[8,1], index: 2, kind: input, shape index: {}]
  %s3 = inlined_call_operand.vmem [shape: f32[2,8,2048], index: 3, kind: output, shape index: {}]
  %s4 = sld [smem:[#allocation0]]
  $region45: #{conv3d_relu6.1} parent=0
    _
  %s6 = ssub.s32 1, %s4
  %s7 = scalar_select 0, %s6, %s4
  loop: start=0, step=1, limit=4
  $region2: #{conv3d_relu6.1} parent=0 // loop_pre_header
    _
  $region3: #{conv3d_relu6.1} parent=0 // loop_header
    %s9 = sphi 0, %s13
    %p10 = scmp.ge.s32.totalorder %s9, 4
    %s19 = sphi 0, %s21
    %s22 = sphi 0, %s19
    %s23 = sphi 0, %s22
    %s39 = sphi 0, %s23
    %s43 = sphi 0, %s43
    %s45 = sphi 0, %s43
    %s46 = sphi 0, %s45
    %s60 = sphi 0, %s46
    %s64 = sphi 0, %s64
    %s66 = sphi 0, %s64
    %s67 = sphi 0, %s66
    %s81 = sphi 0, %s67
    %s87 = sphi 0, %s89
    %s90 = sphi 0, %s87
    %s91 = sphi 0, %s90
    %s107 = sphi 0, %s91
  $region4: #{conv3d_relu6.1} parent=0 // loop_header_branch
    %12 = sbr.rel (%p10) target = $region8
  $region5: #{conv3d_relu6.1} parent=0 // loop_body
    %s14 = ssub.s32 %s9, 1
    %s15 = ssub.s32 %s9, 2
    %s16 = sadd.s32 %s9, 1
    %s17 = ssub.s32 %s9, %s16
    %p18 = scmp.eq.s32.totalorder %s17, 0
    %s20 = sadd.s32 %s19, 1
    %s21 = scalar_select %p18, %s19, %s20
    %p24 = pneg %p18
    %p25 = scmp.eq.s32.totalorder %s9, 1
    %p26 = por %p24, %p25
    %p27 = scmp.ne.s32.totalorder %s19, %s22
    %p28 = scmp.eq.s32.totalorder %s9, 0
    %p29 = por %p27, %p28
    %p30 = scmp.ne.s32.totalorder %s19, %s22
    %p31 = scmp.eq.s32.totalorder %s14, 1
    %p32 = por %p30, %p31
    %p33 = scmp.ne.s32.totalorder %s22, %s23
    %p34 = scmp.eq.s32.totalorder %s14, 0
    %p35 = por %p33, %p34
    %p36 = scmp.ne.s32.totalorder %s22, %s23
    %p37 = scmp.eq.s32.totalorder %s15, 1
    %p38 = por %p36, %p37
    %p40 = scmp.ne.s32.totalorder %s23, %s39
    %p41 = scmp.eq.s32.totalorder %s15, 0
    %p42 = por %p40, %p41
    %s44 = sadd.s32 %s43, 1
    %p47 = scmp.eq.s32.totalorder %s9, 1
    %p48 = scmp.ne.s32.totalorder %s43, %s45
    %p49 = scmp.eq.s32.totalorder %s9, 0
    %p50 = por %p48, %p49
    %p51 = scmp.ne.s32.totalorder %s43, %s45
    %p52 = scmp.eq.s32.totalorder %s14, 1
    %p53 = por %p51, %p52
    %p54 = scmp.ne.s32.totalorder %s45, %s46
    %p55 = scmp.eq.s32.totalorder %s14, 0
    %p56 = por %p54, %p55
    %p57 = scmp.ne.s32.totalorder %s45, %s46
    %p58 = scmp.eq.s32.totalorder %s15, 1
    %p59 = por %p57, %p58
    %p61 = scmp.ne.s32.totalorder %s46, %s60
    %p62 = scmp.eq.s32.totalorder %s15, 0
    %p63 = por %p61, %p62
    %s65 = sadd.s32 %s64, 1
    %p68 = scmp.eq.s32.totalorder %s9, 1
    %p69 = scmp.ne.s32.totalorder %s64, %s66
    %p70 = scmp.eq.s32.totalorder %s9, 0
    %p71 = por %p69, %p70
    %p72 = scmp.ne.s32.totalorder %s64, %s66
    %p73 = scmp.eq.s32.totalorder %s14, 1
    %p74 = por %p72, %p73
    %p75 = scmp.ne.s32.totalorder %s66, %s67
    %p76 = scmp.eq.s32.totalorder %s14, 0
    %p77 = por %p75, %p76
    %p78 = scmp.ne.s32.totalorder %s66, %s67
    %p79 = scmp.eq.s32.totalorder %s15, 1
    %p80 = por %p78, %p79
    %p82 = scmp.ne.s32.totalorder %s67, %s81
    %p83 = scmp.eq.s32.totalorder %s15, 0
    %p84 = por %p82, %p83
    %s85 = ssub.s32 %s9, %s16
    %p86 = scmp.eq.s32.totalorder %s85, 0
    %s88 = sadd.s32 %s87, 1
    %s89 = scalar_select %p86, %s87, %s88
    %p92 = pneg %p86
    %p93 = scmp.eq.s32.totalorder %s9, 1
    %p94 = por %p92, %p93
    %p95 = scmp.ne.s32.totalorder %s87, %s90
    %p96 = scmp.eq.s32.totalorder %s9, 0
    %p97 = por %p95, %p96
    %p98 = scmp.ne.s32.totalorder %s87, %s90
    %p99 = scmp.eq.s32.totalorder %s14, 1
    %p100 = por %p98, %p99
    %p101 = scmp.ne.s32.totalorder %s90, %s91
    %p102 = scmp.eq.s32.totalorder %s14, 0
    %p103 = por %p101, %p102
    %p104 = scmp.ne.s32.totalorder %s90, %s91
    %p105 = scmp.eq.s32.totalorder %s15, 1
    %p106 = por %p104, %p105
    %p108 = scmp.ne.s32.totalorder %s91, %s107
    %p109 = scmp.eq.s32.totalorder %s15, 0
    %p110 = por %p108, %p109
    %p111 = scmp.le.s32.totalorder 1, %s9
    %p112 = scmp.lt.s32.totalorder %s9, 3
    %p113 = pnand %p111, %p112
    %p114 = pneg %p113
    // Predicated region
    $region9: #{conv3d_relu6.1} parent=5 // pred_check
      _
    $region10: #{conv3d_relu6.1} parent=5 // pred_check_branch
      %116 = sbr.rel (%p113) target = $region12
    $region11: #{conv3d_relu6.1} parent=5 // pred_region
      %s117 = ssub.s32 %s9, 1
      // Predicated region
      $region13: #{conv3d_relu6.1} parent=11 // pred_check
        %p118 = pneg %p56
      $region14: #{conv3d_relu6.1} parent=11 // pred_check_branch
        %120 = sbr.rel (%p118) target = $region16
      $region15: #{conv3d_relu6.1} parent=11 // pred_region
        _
      $region16: #{conv3d_relu6.1} parent=11 // pred_fallthru
        _
      // Predicated region
      $region17: #{conv3d_relu6.1} parent=11 // pred_check
        %p121 = pneg %p77
      $region18: #{conv3d_relu6.1} parent=11 // pred_check_branch
        %123 = sbr.rel (%p121) target = $region20
      $region19: #{conv3d_relu6.1} parent=11 // pred_region
        _
      $region20: #{conv3d_relu6.1} parent=11 // pred_fallthru
        _
    $region12: #{conv3d_relu6.1} parent=5 // pred_fallthru
      _
    %p124 = scmp.lt.s32.totalorder %s9, 2
    // Predicated region
    $region21: #{conv3d_relu6.1} parent=5 // pred_check
      %p125 = pneg %p124
    $region22: #{conv3d_relu6.1} parent=5 // pred_check_branch
      %127 = sbr.rel (%p125) target = $region24
    $region23: #{conv3d_relu6.1} parent=5 // pred_region
      // Predicated region
      $region25: #{conv3d_relu6.1} parent=23 // pred_check
        %p128 = pneg %p29
      $region26: #{conv3d_relu6.1} parent=23 // pred_check_branch
        %130 = sbr.rel (%p128) target = $region28
      $region27: #{conv3d_relu6.1} parent=23 // pred_region
        %p131 = scmp.lt.s32.totalorder %s9, 1
        %s132 = scalar_select %p131, %s9, 1
        %s133 = smul.addr %s132, 100
        %s134 = smul.addr %s133, 8
        %s135 = scalar_lea.vmem %s0, %s134
      $region28: #{conv3d_relu6.1} parent=23 // pred_fallthru
        _
    $region24: #{conv3d_relu6.1} parent=5 // pred_fallthru
      _
    %p136 = scmp.le.s32.totalorder 1, %s9
    %p137 = scmp.lt.s32.totalorder %s9, 3
    %p138 = pnand %p136, %p137
    %p139 = pneg %p138
    // Predicated region
    $region29: #{conv3d_relu6.1} parent=5 // pred_check
      _
    $region30: #{conv3d_relu6.1} parent=5 // pred_check_branch
      %141 = sbr.rel (%p138) target = $region32
    $region31: #{conv3d_relu6.1} parent=5 // pred_region
      %s142 = ssub.s32 %s9, 1
      %p143 = scmp.lt.s32.totalorder %s14, 1
      %s144 = scalar_select %p143, %s14, 1
      %s145 = smul.addr %s144, 100
      %s146 = smul.addr %s145, 8
      %s147 = scalar_lea.vmem %s0, %s146
      %p148 = pneg %p35
      %p149 = pneg %p32
      %p150 = pneg %p56
      %p151 = pneg %p53
      %p152 = pneg %p77
      %p153 = pneg %p74
      %p154 = pneg %p103
      %p155 = pneg %p100
      %p156 = scmp.lt.s32.totalorder %s14, 1
      %s157 = scalar_select %p156, %s14, 1
      %s158 = smul.addr %s157, 16
      %s159 = smul.addr %s158, 8
      %s160 = scalar_lea.vmem %s3, %s159
      %p161 = scmp.lt.s32.totalorder %s14, 1
      %s162 = scalar_select %p161, %s14, 1
      %s163 = smul.addr %s162, 100
      %s164 = smul.addr %s163, 8
      %s165 = scalar_lea.vmem %s0, %s164
      %p166 = scmp.lt.s32.totalorder %s14, 1
      %s167 = scalar_select %p166, %s14, 1
      %s168 = smul.addr %s167, 16
      %s169 = smul.addr %s168, 8
      %s170 = scalar_lea.vmem %s3, %s169
      %v171 = vld [vmem:[%s2] sm:$0xff]
      %173 = vset.pattern.permute.xlu0 0
      %174 = vperm.xlu0 %173, %v171
      %v175 = vpop.permute.xlu0 %174
      %v177 = vld [vmem:[%s1] sm:$0xff]
      %v178 = vld [vmem:[%s165] sm:$0xff]
      %v179 = vld [vmem:[%s165 + $0x8] sm:$0xff]
      %v180 = vld [vmem:[%s165 + $0x10] sm:$0xff]
      %v181 = vld [vmem:[%s165 + $0x18] sm:$0xff]
      %v182 = vld [vmem:[%s165 + $0x20] sm:$0xff]
      %v183 = vld [vmem:[%s165 + $0x28] sm:$0xff]
      %v184 = vld [vmem:[%s165 + $0x30] sm:$0xff]
      %v185 = vld [vmem:[%s165 + $0x38] sm:$0xff]
      %v186 = vld [vmem:[%s165 + $0x40] sm:$0xf]
      %v187 = vld [vmem:[%s165 + $0x48] sm:$0xf]
      %vm188 = vcmask 293888
      %v190 = vsel %vm188, %v177, 0
      %vm192 = vcmask 1043456
      %v194 = vsel %vm192, %v186, 0
      %v197 = vsel %vm192, %v187, 0
      %199 = vmatprep.subr.mxu0 0.0
      %200 = vmatpush1.msra.mxu0 0.0
      %201 = vmatprep.subr.mxu0 0.0
      %202 = vmatpush1.msra.mxu0 0.0
      %203 = vmatprep.subr.mxu0 0.0
      %204 = vmatpush1.msra.mxu0 0.0
      %205 = vmatprep.subr.mxu0 0.0
      %206 = vmatpush1.msra.mxu0 0.0
      %207 = vmatprep.subr.mxu0 0.0
      %208 = vmatpush1.msra.mxu0 0.0
      %209 = vmatprep.subr.mxu0 0.0
      %210 = vmatpush1.msra.mxu0 0.0
      %211 = vmatprep.subr.mxu0 0.0
      %212 = vmatpush1.msra.mxu0 0.0
      %213 = vmatprep.subr.mxu0 0.0
      %214 = vmatpush1.msra.mxu0 0.0
      %215 = vmatprep.subr.mxu0 0.0
      %216 = vmatpush1.msra.mxu0 0.0
      %217 = vmatprep.subr.mxu0 0.0
      %218 = vmatpush1.msra.mxu0 0.0
      %219 = vmatprep.subr.mxu0 0.0
      %220 = vmatpush1.msra.mxu0 0.0
      %221 = vmatprep.subr.mxu0 %v197
      %222 = vmatpush1.msra.mxu0 %v194
      %223 = vmatprep.subr.mxu0 %v185
      %224 = vmatpush1.msra.mxu0 %v184
      %225 = vmatprep.subr.mxu0 %v183
      %226 = vmatpush1.msra.mxu0 %v182
      %227 = vmatprep.subr.mxu0 %v181
      %228 = vmatpush1.msra.mxu0 %v180
      %229 = vmatprep.subr.mxu0 %v179
      %230 = vmatpush1.msra.mxu0 %v178
      %231 = vmatprep.subr.mxu0 0.0
      %232 = vmatpush2.msra.mxu0 0.0
      %233 = vmatprep.subr.mxu0 0.0
      %234 = vmatpush2.msra.mxu0 0.0
      %235 = vmatprep.subr.mxu0 0.0
      %236 = vmatpush2.msra.mxu0 0.0
      %237 = vmatprep.subr.mxu0 0.0
      %238 = vmatpush2.msra.mxu0 0.0
      %239 = vmatprep.subr.mxu0 0.0
      %240 = vmatpush2.msra.mxu0 0.0
      %241 = vmatprep.subr.mxu0 0.0
      %242 = vmatpush2.msra.mxu0 0.0
      %243 = vmatprep.subr.mxu0 0.0
      %244 = vmatpush2.msra.mxu0 0.0
      %245 = vmatprep.subr.mxu0 0.0
      %246 = vmatpush2.msra.mxu0 0.0
      %247 = vmatprep.subr.mxu0 0.0
      %248 = vmatpush2.msra.mxu0 0.0
      %249 = vmatprep.subr.mxu0 0.0
      %250 = vmatpush2.msra.mxu0 0.0
      %251 = vmatprep.subr.mxu0 0.0
      %252 = vmatpush2.msra.mxu0 0.0
      %253 = vmatprep.subr.mxu0 0.0
      %254 = vmatpush2.msra.mxu0 0.0
      %255 = vmatprep.subr.mxu0 0.0
      %256 = vmatpush2.msra.mxu0 0.0
      %257 = vmatprep.subr.mxu0 0.0
      %258 = vmatpush2.msra.mxu0 0.0
      %259 = vmatprep.subr.mxu0 0.0
      %260 = vmatpush2.msra.mxu0 0.0
      %261 = vmatprep.subr.mxu0 0.0
      %262 = vmatpush2.msra.mxu0 0.0
      %263 = vmatprep.mubr.f32.mxu0 0.0
      %264 = vmatmul.mubr.f32.gmra.mxu0 %v190
      %v265 = vpop.f32.mrf.mxu0
      %v266 = vadd.f32 0.0, %v265
      %v267 = vpop.f32.mrf.mxu0
      %v268 = vadd.f32 0.0, %v267
      %269 = vdwg.mxu0
      %v270 = vadd.f32 %v175, %v266
      %v271 = vadd.f32 %v175, %v268
      %s272 = scalar_lea.vmem %s1, 8
      %v273 = vld [vmem:[%s272] sm:$0xff]
      %s274 = scalar_lea.vmem %s165, 80
      %v275 = vld [vmem:[%s274] sm:$0xff]
      %v276 = vld [vmem:[%s274 + $0x8] sm:$0xff]
      %v277 = vld [vmem:[%s274 + $0x10] sm:$0xff]
      %v278 = vld [vmem:[%s274 + $0x18] sm:$0xff]
      %v279 = vld [vmem:[%s274 + $0x20] sm:$0xff]
      %v280 = vld [vmem:[%s274 + $0x28] sm:$0xff]
      %v281 = vld [vmem:[%s274 + $0x30] sm:$0xff]
      %v282 = vld [vmem:[%s274 + $0x38] sm:$0xff]
      %v283 = vld [vmem:[%s274 + $0x40] sm:$0xf]
      %v284 = vld [vmem:[%s274 + $0x48] sm:$0xf]
      %v286 = vsel %vm188, %v273, 0
      %v289 = vsel %vm192, %v283, 0
      %v292 = vsel %vm192, %v284, 0
      %294 = vmatprep.subr.mxu0 0.0
      %295 = vmatpush1.msra.mxu0 0.0
      %296 = vmatprep.subr.mxu0 0.0
      %297 = vmatpush1.msra.mxu0 0.0
      %298 = vmatprep.subr.mxu0 0.0
      %299 = vmatpush1.msra.mxu0 0.0
      %300 = vmatprep.subr.mxu0 0.0
      %301 = vmatpush1.msra.mxu0 0.0
      %302 = vmatprep.subr.mxu0 0.0
      %303 = vmatpush1.msra.mxu0 0.0
      %304 = vmatprep.subr.mxu0 0.0
      %305 = vmatpush1.msra.mxu0 0.0
      %306 = vmatprep.subr.mxu0 0.0
      %307 = vmatpush1.msra.mxu0 0.0
      %308 = vmatprep.subr.mxu0 0.0
      %309 = vmatpush1.msra.mxu0 0.0
      %310 = vmatprep.subr.mxu0 0.0
      %311 = vmatpush1.msra.mxu0 0.0
      %312 = vmatprep.subr.mxu0 0.0
      %313 = vmatpush1.msra.mxu0 0.0
      %314 = vmatprep.subr.mxu0 0.0
      %315 = vmatpush1.msra.mxu0 0.0
      %316 = vmatprep.subr.mxu0 %v292
      %317 = vmatpush1.msra.mxu0 %v289
      %318 = vmatprep.subr.mxu0 %v282
      %319 = vmatpush1.msra.mxu0 %v281
      %320 = vmatprep.subr.mxu0 %v280
      %321 = vmatpush1.msra.mxu0 %v279
      %322 = vmatprep.subr.mxu0 %v278
      %323 = vmatpush1.msra.mxu0 %v277
      %324 = vmatprep.subr.mxu0 %v276
      %325 = vmatpush1.msra.mxu0 %v275
      %326 = vmatprep.subr.mxu0 0.0
      %327 = vmatpush2.msra.mxu0 0.0
      %328 = vmatprep.subr.mxu0 0.0
      %329 = vmatpush2.msra.mxu0 0.0
      %330 = vmatprep.subr.mxu0 0.0
      %331 = vmatpush2.msra.mxu0 0.0
      %332 = vmatprep.subr.mxu0 0.0
      %333 = vmatpush2.msra.mxu0 0.0
      %334 = vmatprep.subr.mxu0 0.0
      %335 = vmatpush2.msra.mxu0 0.0
      %336 = vmatprep.subr.mxu0 0.0
      %337 = vmatpush2.msra.mxu0 0.0
      %338 = vmatprep.subr.mxu0 0.0
      %339 = vmatpush2.msra.mxu0 0.0
      %340 = vmatprep.subr.mxu0 0.0
      %341 = vmatpush2.msra.mxu0 0.0
      %342 = vmatprep.subr.mxu0 0.0
      %343 = vmatpush2.msra.mxu0 0.0
      %344 = vmatprep.subr.mxu0 0.0
      %345 = vmatpush2.msra.mxu0 0.0
      %346 = vmatprep.subr.mxu0 0.0
      %347 = vmatpush2.msra.mxu0 0.0
      %348 = vmatprep.subr.mxu0 0.0
      %349 = vmatpush2.msra.mxu0 0.0
      %350 = vmatprep.subr.mxu0 0.0
      %351 = vmatpush2.msra.mxu0 0.0
      %352 = vmatprep.subr.mxu0 0.0
      %353 = vmatpush2.msra.mxu0 0.0
      %354 = vmatprep.subr.mxu0 0.0
      %355 = vmatpush2.msra.mxu0 0.0
      %356 = vmatprep.subr.mxu0 0.0
      %357 = vmatpush2.msra.mxu0 0.0
      %358 = vmatprep.mubr.f32.mxu0 0.0
      %359 = vmatmul.mubr.f32.gmra.mxu0 %v286
      %v360 = vpop.f32.mrf.mxu0
      %v361 = vadd.f32 0.0, %v360
      %v362 = vpop.f32.mrf.mxu0
      %v363 = vadd.f32 0.0, %v362
      %364 = vdwg.mxu0
      %v365 = vadd.f32 %v270, %v361
      %v366 = vadd.f32 %v271, %v363
      %s367 = scalar_lea.vmem %s1, 16
      %v368 = vld [vmem:[%s367] sm:$0xff]
      %s369 = scalar_lea.vmem %s165, 160
      %v370 = vld [vmem:[%s369] sm:$0xff]
      %v371 = vld [vmem:[%s369 + $0x8] sm:$0xff]
      %v372 = vld [vmem:[%s369 + $0x10] sm:$0xff]
      %v373 = vld [vmem:[%s369 + $0x18] sm:$0xff]
      %v374 = vld [vmem:[%s369 + $0x20] sm:$0xff]
      %v375 = vld [vmem:[%s369 + $0x28] sm:$0xff]
      %v376 = vld [vmem:[%s369 + $0x30] sm:$0xff]
      %v377 = vld [vmem:[%s369 + $0x38] sm:$0xff]
      %v378 = vld [vmem:[%s369 + $0x40] sm:$0xf]
      %v379 = vld [vmem:[%s369 + $0x48] sm:$0xf]
      %v381 = vsel %vm188, %v368, 0
      %v384 = vsel %vm192, %v378, 0
      %v387 = vsel %vm192, %v379, 0
      %389 = vmatprep.subr.mxu0 0.0
      %390 = vmatpush1.msra.mxu0 0.0
      %391 = vmatprep.subr.mxu0 0.0
      %392 = vmatpush1.msra.mxu0 0.0
      %393 = vmatprep.subr.mxu0 0.0
      %394 = vmatpush1.msra.mxu0 0.0
      %395 = vmatprep.subr.mxu0 0.0
      %396 = vmatpush1.msra.mxu0 0.0
      %397 = vmatprep.subr.mxu0 0.0
      %398 = vmatpush1.msra.mxu0 0.0
      %399 = vmatprep.subr.mxu0 0.0
      %400 = vmatpush1.msra.mxu0 0.0
      %401 = vmatprep.subr.mxu0 0.0
      %402 = vmatpush1.msra.mxu0 0.0
      %403 = vmatprep.subr.mxu0 0.0
      %404 = vmatpush1.msra.mxu0 0.0
      %405 = vmatprep.subr.mxu0 0.0
      %406 = vmatpush1.msra.mxu0 0.0
      %407 = vmatprep.subr.mxu0 0.0
      %408 = vmatpush1.msra.mxu0 0.0
      %409 = vmatprep.subr.mxu0 0.0
      %410 = vmatpush1.msra.mxu0 0.0
      %411 = vmatprep.subr.mxu0 %v387
      %412 = vmatpush1.msra.mxu0 %v384
      %413 = vmatprep.subr.mxu0 %v377
      %414 = vmatpush1.msra.mxu0 %v376
      %415 = vmatprep.subr.mxu0 %v375
      %416 = vmatpush1.msra.mxu0 %v374
      %417 = vmatprep.subr.mxu0 %v373
      %418 = vmatpush1.msra.mxu0 %v372
      %419 = vmatprep.subr.mxu0 %v371
      %420 = vmatpush1.msra.mxu0 %v370
      %421 = vmatprep.subr.mxu0 0.0
      %422 = vmatpush2.msra.mxu0 0.0
      %423 = vmatprep.subr.mxu0 0.0
      %424 = vmatpush2.msra.mxu0 0.0
      %425 = vmatprep.subr.mxu0 0.0
      %426 = vmatpush2.msra.mxu0 0.0
      %427 = vmatprep.subr.mxu0 0.0
      %428 = vmatpush2.msra.mxu0 0.0
      %429 = vmatprep.subr.mxu0 0.0
      %430 = vmatpush2.msra.mxu0 0.0
      %431 = vmatprep.subr.mxu0 0.0
      %432 = vmatpush2.msra.mxu0 0.0
      %433 = vmatprep.subr.mxu0 0.0
      %434 = vmatpush2.msra.mxu0 0.0
      %435 = vmatprep.subr.mxu0 0.0
      %436 = vmatpush2.msra.mxu0 0.0
      %437 = vmatprep.subr.mxu0 0.0
      %438 = vmatpush2.msra.mxu0 0.0
      %439 = vmatprep.subr.mxu0 0.0
      %440 = vmatpush2.msra.mxu0 0.0
      %441 = vmatprep.subr.mxu0 0.0
      %442 = vmatpush2.msra.mxu0 0.0
      %443 = vmatprep.subr.mxu0 0.0
      %444 = vmatpush2.msra.mxu0 0.0
      %445 = vmatprep.subr.mxu0 0.0
      %446 = vmatpush2.msra.mxu0 0.0
      %447 = vmatprep.subr.mxu0 0.0
      %448 = vmatpush2.msra.mxu0 0.0
      %449 = vmatprep.subr.mxu0 0.0
      %450 = vmatpush2.msra.mxu0 0.0
      %451 = vmatprep.subr.mxu0 0.0
      %452 = vmatpush2.msra.mxu0 0.0
      %453 = vmatprep.mubr.f32.mxu0 0.0
      %454 = vmatmul.mubr.f32.gmra.mxu0 %v381
      %v455 = vpop.f32.mrf.mxu0
      %v456 = vadd.f32 0.0, %v455
      %v457 = vpop.f32.mrf.mxu0
      %v458 = vadd.f32 0.0, %v457
      %459 = vdwg.mxu0
      %v460 = vadd.f32 %v365, %v456
      %v461 = vadd.f32 %v366, %v458
      %v462 = vmax.f32 %v460, 0.0
      %v463 = vmax.f32 %v461, 0.0
      %v464 = vmin.f32 %v462, 6.0
      %v465 = vmin.f32 %v463, 6.0
      %466 = vst [vmem:[%s170] sm:$0xff] %v464
      %467 = vst [vmem:[%s170 + $0x8] sm:$0xff] %v465
      %v468 = vld [vmem:[%s1] sm:$0xff]
      %v469 = vld [vmem:[%s274] sm:$0xff]
      %v470 = vld [vmem:[%s274 + $0x8] sm:$0xff]
      %v471 = vld [vmem:[%s274 + $0x10] sm:$0xff]
      %v472 = vld [vmem:[%s274 + $0x18] sm:$0xff]
      %v473 = vld [vmem:[%s274 + $0x20] sm:$0xff]
      %v474 = vld [vmem:[%s274 + $0x28] sm:$0xff]
      %v475 = vld [vmem:[%s274 + $0x30] sm:$0xff]
      %v476 = vld [vmem:[%s274 + $0x38] sm:$0xff]
      %v477 = vld [vmem:[%s274 + $0x40] sm:$0xf]
      %v478 = vld [vmem:[%s274 + $0x48] sm:$0xf]
      %v480 = vsel %vm188, %v468, 0
      %v483 = vsel %vm192, %v477, 0
      %v486 = vsel %vm192, %v478, 0
      %488 = vmatprep.subr.mxu0 0.0
      %489 = vmatpush1.msra.mxu0 0.0
      %490 = vmatprep.subr.mxu0 0.0
      %491 = vmatpush1.msra.mxu0 0.0
      %492 = vmatprep.subr.mxu0 0.0
      %493 = vmatpush1.msra.mxu0 0.0
      %494 = vmatprep.subr.mxu0 0.0
      %495 = vmatpush1.msra.mxu0 0.0
      %496 = vmatprep.subr.mxu0 0.0
      %497 = vmatpush1.msra.mxu0 0.0
      %498 = vmatprep.subr.mxu0 0.0
      %499 = vmatpush1.msra.mxu0 0.0
      %500 = vmatprep.subr.mxu0 0.0
      %501 = vmatpush1.msra.mxu0 0.0
      %502 = vmatprep.subr.mxu0 0.0
      %503 = vmatpush1.msra.mxu0 0.0
      %504 = vmatprep.subr.mxu0 0.0
      %505 = vmatpush1.msra.mxu0 0.0
      %506 = vmatprep.subr.mxu0 0.0
      %507 = vmatpush1.msra.mxu0 0.0
      %508 = vmatprep.subr.mxu0 0.0
      %509 = vmatpush1.msra.mxu0 0.0
      %510 = vmatprep.subr.mxu0 %v486
      %511 = vmatpush1.msra.mxu0 %v483
      %512 = vmatprep.subr.mxu0 %v476
      %513 = vmatpush1.msra.mxu0 %v475
      %514 = vmatprep.subr.mxu0 %v474
      %515 = vmatpush1.msra.mxu0 %v473
      %516 = vmatprep.subr.mxu0 %v472
      %517 = vmatpush1.msra.mxu0 %v471
      %518 = vmatprep.subr.mxu0 %v470
      %519 = vmatpush1.msra.mxu0 %v469
      %520 = vmatprep.subr.mxu0 0.0
      %521 = vmatpush2.msra.mxu0 0.0
      %522 = vmatprep.subr.mxu0 0.0
      %523 = vmatpush2.msra.mxu0 0.0
      %524 = vmatprep.subr.mxu0 0.0
      %525 = vmatpush2.msra.mxu0 0.0
      %526 = vmatprep.subr.mxu0 0.0
      %527 = vmatpush2.msra.mxu0 0.0
      %528 = vmatprep.subr.mxu0 0.0
      %529 = vmatpush2.msra.mxu0 0.0
      %530 = vmatprep.subr.mxu0 0.0
      %531 = vmatpush2.msra.mxu0 0.0
      %532 = vmatprep.subr.mxu0 0.0
      %533 = vmatpush2.msra.mxu0 0.0
      %534 = vmatprep.subr.mxu0 0.0
      %535 = vmatpush2.msra.mxu0 0.0
      %536 = vmatprep.subr.mxu0 0.0
      %537 = vmatpush2.msra.mxu0 0.0
      %538 = vmatprep.subr.mxu0 0.0
      %539 = vmatpush2.msra.mxu0 0.0
      %540 = vmatprep.subr.mxu0 0.0
      %541 = vmatpush2.msra.mxu0 0.0
      %542 = vmatprep.subr.mxu0 0.0
      %543 = vmatpush2.msra.mxu0 0.0
      %544 = vmatprep.subr.mxu0 0.0
      %545 = vmatpush2.msra.mxu0 0.0
      %546 = vmatprep.subr.mxu0 0.0
      %547 = vmatpush2.msra.mxu0 0.0
      %548 = vmatprep.subr.mxu0 0.0
      %549 = vmatpush2.msra.mxu0 0.0
      %550 = vmatprep.subr.mxu0 0.0
      %551 = vmatpush2.msra.mxu0 0.0
      %552 = vmatprep.mubr.f32.mxu0 0.0
      %553 = vmatmul.mubr.f32.gmra.mxu0 %v480
      %v554 = vpop.f32.mrf.mxu0
      %v555 = vadd.f32 0.0, %v554
      %v556 = vpop.f32.mrf.mxu0
      %v557 = vadd.f32 0.0, %v556
      %558 = vdwg.mxu0
      %v559 = vadd.f32 %v175, %v555
      %v560 = vadd.f32 %v175, %v557
      %v561 = vld [vmem:[%s272] sm:$0xff]
      %v562 = vld [vmem:[%s369] sm:$0xff]
      %v563 = vld [vmem:[%s369 + $0x8] sm:$0xff]
      %v564 = vld [vmem:[%s369 + $0x10] sm:$0xff]
      %v565 = vld [vmem:[%s369 + $0x18] sm:$0xff]
      %v566 = vld [vmem:[%s369 + $0x20] sm:$0xff]
      %v567 = vld [vmem:[%s369 + $0x28] sm:$0xff]
      %v568 = vld [vmem:[%s369 + $0x30] sm:$0xff]
      %v569 = vld [vmem:[%s369 + $0x38] sm:$0xff]
      %v570 = vld [vmem:[%s369 + $0x40] sm:$0xf]
      %v571 = vld [vmem:[%s369 + $0x48] sm:$0xf]
      %v573 = vsel %vm188, %v561, 0
      %v576 = vsel %vm192, %v570, 0
      %v579 = vsel %vm192, %v571, 0
      %581 = vmatprep.subr.mxu0 0.0
      %582 = vmatpush1.msra.mxu0 0.0
      %583 = vmatprep.subr.mxu0 0.0
      %584 = vmatpush1.msra.mxu0 0.0
      %585 = vmatprep.subr.mxu0 0.0
      %586 = vmatpush1.msra.mxu0 0.0
      %587 = vmatprep.subr.mxu0 0.0
      %588 = vmatpush1.msra.mxu0 0.0
      %589 = vmatprep.subr.mxu0 0.0
      %590 = vmatpush1.msra.mxu0 0.0
      %591 = vmatprep.subr.mxu0 0.0
      %592 = vmatpush1.msra.mxu0 0.0
      %593 = vmatprep.subr.mxu0 0.0
      %594 = vmatpush1.msra.mxu0 0.0
      %595 = vmatprep.subr.mxu0 0.0
      %596 = vmatpush1.msra.mxu0 0.0
      %597 = vmatprep.subr.mxu0 0.0
      %598 = vmatpush1.msra.mxu0 0.0
      %599 = vmatprep.subr.mxu0 0.0
      %600 = vmatpush1.msra.mxu0 0.0
      %601 = vmatprep.subr.mxu0 0.0
      %602 = vmatpush1.msra.mxu0 0.0
      %603 = vmatprep.subr.mxu0 %v579
      %604 = vmatpush1.msra.mxu0 %v576
      %605 = vmatprep.subr.mxu0 %v569
      %606 = vmatpush1.msra.mxu0 %v568
      %607 = vmatprep.subr.mxu0 %v567
      %608 = vmatpush1.msra.mxu0 %v566
      %609 = vmatprep.subr.mxu0 %v565
      %610 = vmatpush1.msra.mxu0 %v564
      %611 = vmatprep.subr.mxu0 %v563
      %612 = vmatpush1.msra.mxu0 %v562
      %613 = vmatprep.subr.mxu0 0.0
      %614 = vmatpush2.msra.mxu0 0.0
      %615 = vmatprep.subr.mxu0 0.0
      %616 = vmatpush2.msra.mxu0 0.0
      %617 = vmatprep.subr.mxu0 0.0
      %618 = vmatpush2.msra.mxu0 0.0
      %619 = vmatprep.subr.mxu0 0.0
      %620 = vmatpush2.msra.mxu0 0.0
      %621 = vmatprep.subr.mxu0 0.0
      %622 = vmatpush2.msra.mxu0 0.0
      %623 = vmatprep.subr.mxu0 0.0
      %624 = vmatpush2.msra.mxu0 0.0
      %625 = vmatprep.subr.mxu0 0.0
      %626 = vmatpush2.msra.mxu0 0.0
      %627 = vmatprep.subr.mxu0 0.0
      %628 = vmatpush2.msra.mxu0 0.0
      %629 = vmatprep.subr.mxu0 0.0
      %630 = vmatpush2.msra.mxu0 0.0
      %631 = vmatprep.subr.mxu0 0.0
      %632 = vmatpush2.msra.mxu0 0.0
      %633 = vmatprep.subr.mxu0 0.0
      %634 = vmatpush2.msra.mxu0 0.0
      %635 = vmatprep.subr.mxu0 0.0
      %636 = vmatpush2.msra.mxu0 0.0
      %637 = vmatprep.subr.mxu0 0.0
      %638 = vmatpush2.msra.mxu0 0.0
      %639 = vmatprep.subr.mxu0 0.0
      %640 = vmatpush2.msra.mxu0 0.0
      %641 = vmatprep.subr.mxu0 0.0
      %642 = vmatpush2.msra.mxu0 0.0
      %643 = vmatprep.subr.mxu0 0.0
      %644 = vmatpush2.msra.mxu0 0.0
      %645 = vmatprep.mubr.f32.mxu0 0.0
      %646 = vmatmul.mubr.f32.gmra.mxu0 %v573
      %v647 = vpop.f32.mrf.mxu0
      %v648 = vadd.f32 0.0, %v647
      %v649 = vpop.f32.mrf.mxu0
      %v650 = vadd.f32 0.0, %v649
      %651 = vdwg.mxu0
      %v652 = vadd.f32 %v559, %v648
      %v653 = vadd.f32 %v560, %v650
      %v654 = vld [vmem:[%s367] sm:$0xff]
      %s655 = scalar_lea.vmem %s165, 240
      %v656 = vld [vmem:[%s655] sm:$0xff]
      %v657 = vld [vmem:[%s655 + $0x8] sm:$0xff]
      %v658 = vld [vmem:[%s655 + $0x10] sm:$0xff]
      %v659 = vld [vmem:[%s655 + $0x18] sm:$0xff]
      %v660 = vld [vmem:[%s655 + $0x20] sm:$0xff]
      %v661 = vld [vmem:[%s655 + $0x28] sm:$0xff]
      %v662 = vld [vmem:[%s655 + $0x30] sm:$0xff]
      %v663 = vld [vmem:[%s655 + $0x38] sm:$0xff]
      %v664 = vld [vmem:[%s655 + $0x40] sm:$0xf]
      %v665 = vld [vmem:[%s655 + $0x48] sm:$0xf]
      %v667 = vsel %vm188, %v654, 0
      %v670 = vsel %vm192, %v664, 0
      %v673 = vsel %vm192, %v665, 0
      %675 = vmatprep.subr.mxu0 0.0
      %676 = vmatpush1.msra.mxu0 0.0
      %677 = vmatprep.subr.mxu0 0.0
      %678 = vmatpush1.msra.mxu0 0.0
      %679 = vmatprep.subr.mxu0 0.0
      %680 = vmatpush1.msra.mxu0 0.0
      %681 = vmatprep.subr.mxu0 0.0
      %682 = vmatpush1.msra.mxu0 0.0
      %683 = vmatprep.subr.mxu0 0.0
      %684 = vmatpush1.msra.mxu0 0.0
      %685 = vmatprep.subr.mxu0 0.0
      %686 = vmatpush1.msra.mxu0 0.0
      %687 = vmatprep.subr.mxu0 0.0
      %688 = vmatpush1.msra.mxu0 0.0
      %689 = vmatprep.subr.mxu0 0.0
      %690 = vmatpush1.msra.mxu0 0.0
      %691 = vmatprep.subr.mxu0 0.0
      %692 = vmatpush1.msra.mxu0 0.0
      %693 = vmatprep.subr.mxu0 0.0
      %694 = vmatpush1.msra.mxu0 0.0
      %695 = vmatprep.subr.mxu0 0.0
      %696 = vmatpush1.msra.mxu0 0.0
      %697 = vmatprep.subr.mxu0 %v673
      %698 = vmatpush1.msra.mxu0 %v670
      %699 = vmatprep.subr.mxu0 %v663
      %700 = vmatpush1.msra.mxu0 %v662
      %701 = vmatprep.subr.mxu0 %v661
      %702 = vmatpush1.msra.mxu0 %v660
      %703 = vmatprep.subr.mxu0 %v659
      %704 = vmatpush1.msra.mxu0 %v658
      %705 = vmatprep.subr.mxu0 %v657
      %706 = vmatpush1.msra.mxu0 %v656
      %707 = vmatprep.subr.mxu0 0.0
      %708 = vmatpush2.msra.mxu0 0.0
      %709 = vmatprep.subr.mxu0 0.0
      %710 = vmatpush2.msra.mxu0 0.0
      %711 = vmatprep.subr.mxu0 0.0
      %712 = vmatpush2.msra.mxu0 0.0
      %713 = vmatprep.subr.mxu0 0.0
      %714 = vmatpush2.msra.mxu0 0.0
      %715 = vmatprep.subr.mxu0 0.0
      %716 = vmatpush2.msra.mxu0 0.0
      %717 = vmatprep.subr.mxu0 0.0
      %718 = vmatpush2.msra.mxu0 0.0
      %719 = vmatprep.subr.mxu0 0.0
      %720 = vmatpush2.msra.mxu0 0.0
      %721 = vmatprep.subr.mxu0 0.0
      %722 = vmatpush2.msra.mxu0 0.0
      %723 = vmatprep.subr.mxu0 0.0
      %724 = vmatpush2.msra.mxu0 0.0
      %725 = vmatprep.subr.mxu0 0.0
      %726 = vmatpush2.msra.mxu0 0.0
      %727 = vmatprep.subr.mxu0 0.0
      %728 = vmatpush2.msra.mxu0 0.0
      %729 = vmatprep.subr.mxu0 0.0
      %730 = vmatpush2.msra.mxu0 0.0
      %731 = vmatprep.subr.mxu0 0.0
      %732 = vmatpush2.msra.mxu0 0.0
      %733 = vmatprep.subr.mxu0 0.0
      %734 = vmatpush2.msra.mxu0 0.0
      %735 = vmatprep.subr.mxu0 0.0
      %736 = vmatpush2.msra.mxu0 0.0
      %737 = vmatprep.subr.mxu0 0.0
      %738 = vmatpush2.msra.mxu0 0.0
      %739 = vmatprep.mubr.f32.mxu0 0.0
      %740 = vmatmul.mubr.f32.gmra.mxu0 %v667
      %v741 = vpop.f32.mrf.mxu0
      %v742 = vadd.f32 0.0, %v741
      %v743 = vpop.f32.mrf.mxu0
      %v744 = vadd.f32 0.0, %v743
      %745 = vdwg.mxu0
      %v746 = vadd.f32 %v652, %v742
      %v747 = vadd.f32 %v653, %v744
      %v748 = vmax.f32 %v746, 0.0
      %v749 = vmax.f32 %v747, 0.0
      %v750 = vmin.f32 %v748, 6.0
      %v751 = vmin.f32 %v749, 6.0
      %752 = vst [vmem:[%s170 + $0x10] sm:$0xff] %v750
      %753 = vst [vmem:[%s170 + $0x18] sm:$0xff] %v751
      %v754 = vld [vmem:[%s1] sm:$0xff]
      %v755 = vld [vmem:[%s369] sm:$0xff]
      %v756 = vld [vmem:[%s369 + $0x8] sm:$0xff]
      %v757 = vld [vmem:[%s369 + $0x10] sm:$0xff]
      %v758 = vld [vmem:[%s369 + $0x18] sm:$0xff]
      %v759 = vld [vmem:[%s369 + $0x20] sm:$0xff]
      %v760 = vld [vmem:[%s369 + $0x28] sm:$0xff]
      %v761 = vld [vmem:[%s369 + $0x30] sm:$0xff]
      %v762 = vld [vmem:[%s369 + $0x38] sm:$0xff]
      %v763 = vld [vmem:[%s369 + $0x40] sm:$0xf]
      %v764 = vld [vmem:[%s369 + $0x48] sm:$0xf]
      %v766 = vsel %vm188, %v754, 0
      %v769 = vsel %vm192, %v763, 0
      %v772 = vsel %vm192, %v764, 0
      %774 = vmatprep.subr.mxu0 0.0
      %775 = vmatpush1.msra.mxu0 0.0
      %776 = vmatprep.subr.mxu0 0.0
      %777 = vmatpush1.msra.mxu0 0.0
      %778 = vmatprep.subr.mxu0 0.0
      %779 = vmatpush1.msra.mxu0 0.0
      %780 = vmatprep.subr.mxu0 0.0
      %781 = vmatpush1.msra.mxu0 0.0
      %782 = vmatprep.subr.mxu0 0.0
      %783 = vmatpush1.msra.mxu0 0.0
      %784 = vmatprep.subr.mxu0 0.0
      %785 = vmatpush1.msra.mxu0 0.0
      %786 = vmatprep.subr.mxu0 0.0
      %787 = vmatpush1.msra.mxu0 0.0
      %788 = vmatprep.subr.mxu0 0.0
      %789 = vmatpush1.msra.mxu0 0.0
      %790 = vmatprep.subr.mxu0 0.0
      %791 = vmatpush1.msra.mxu0 0.0
      %792 = vmatprep.subr.mxu0 0.0
      %793 = vmatpush1.msra.mxu0 0.0
      %794 = vmatprep.subr.mxu0 0.0
      %795 = vmatpush1.msra.mxu0 0.0
      %796 = vmatprep.subr.mxu0 %v772
      %797 = vmatpush1.msra.mxu0 %v769
      %798 = vmatprep.subr.mxu0 %v762
      %799 = vmatpush1.msra.mxu0 %v761
      %800 = vmatprep.subr.mxu0 %v760
      %801 = vmatpush1.msra.mxu0 %v759
      %802 = vmatprep.subr.mxu0 %v758
      %803 = vmatpush1.msra.mxu0 %v757
      %804 = vmatprep.subr.mxu0 %v756
      %805 = vmatpush1.msra.mxu0 %v755
      %806 = vmatprep.subr.mxu0 0.0
      %807 = vmatpush2.msra.mxu0 0.0
      %808 = vmatprep.subr.mxu0 0.0
      %809 = vmatpush2.msra.mxu0 0.0
      %810 = vmatprep.subr.mxu0 0.0
      %811 = vmatpush2.msra.mxu0 0.0
      %812 = vmatprep.subr.mxu0 0.0
      %813 = vmatpush2.msra.mxu0 0.0
      %814 = vmatprep.subr.mxu0 0.0
      %815 = vmatpush2.msra.mxu0 0.0
      %816 = vmatprep.subr.mxu0 0.0
      %817 = vmatpush2.msra.mxu0 0.0
      %818 = vmatprep.subr.mxu0 0.0
      %819 = vmatpush2.msra.mxu0 0.0
      %820 = vmatprep.subr.mxu0 0.0
      %821 = vmatpush2.msra.mxu0 0.0
      %822 = vmatprep.subr.mxu0 0.0
      %823 = vmatpush2.msra.mxu0 0.0
      %824 = vmatprep.subr.mxu0 0.0
      %825 = vmatpush2.msra.mxu0 0.0
      %826 = vmatprep.subr.mxu0 0.0
      %827 = vmatpush2.msra.mxu0 0.0
      %828 = vmatprep.subr.mxu0 0.0
      %829 = vmatpush2.msra.mxu0 0.0
      %830 = vmatprep.subr.mxu0 0.0
      %831 = vmatpush2.msra.mxu0 0.0
      %832 = vmatprep.subr.mxu0 0.0
      %833 = vmatpush2.msra.mxu0 0.0
      %834 = vmatprep.subr.mxu0 0.0
      %835 = vmatpush2.msra.mxu0 0.0
      %836 = vmatprep.subr.mxu0 0.0
      %837 = vmatpush2.msra.mxu0 0.0
      %838 = vmatprep.mubr.f32.mxu0 0.0
      %839 = vmatmul.mubr.f32.gmra.mxu0 %v766
      %v840 = vpop.f32.mrf.mxu0
      %v841 = vadd.f32 0.0, %v840
      %v842 = vpop.f32.mrf.mxu0
      %v843 = vadd.f32 0.0, %v842
      %844 = vdwg.mxu0
      %v845 = vadd.f32 %v175, %v841
      %v846 = vadd.f32 %v175, %v843
      %v847 = vld [vmem:[%s272] sm:$0xff]
      %v848 = vld [vmem:[%s655] sm:$0xff]
      %v849 = vld [vmem:[%s655 + $0x8] sm:$0xff]
      %v850 = vld [vmem:[%s655 + $0x10] sm:$0xff]
      %v851 = vld [vmem:[%s655 + $0x18] sm:$0xff]
      %v852 = vld [vmem:[%s655 + $0x20] sm:$0xff]
      %v853 = vld [vmem:[%s655 + $0x28] sm:$0xff]
      %v854 = vld [vmem:[%s655 + $0x30] sm:$0xff]
      %v855 = vld [vmem:[%s655 + $0x38] sm:$0xff]
      %v856 = vld [vmem:[%s655 + $0x40] sm:$0xf]
      %v857 = vld [vmem:[%s655 + $0x48] sm:$0xf]
      %v859 = vsel %vm188, %v847, 0
      %v862 = vsel %vm192, %v856, 0
      %v865 = vsel %vm192, %v857, 0
      %867 = vmatprep.subr.mxu0 0.0
      %868 = vmatpush1.msra.mxu0 0.0
      %869 = vmatprep.subr.mxu0 0.0
      %870 = vmatpush1.msra.mxu0 0.0
      %871 = vmatprep.subr.mxu0 0.0
      %872 = vmatpush1.msra.mxu0 0.0
      %873 = vmatprep.subr.mxu0 0.0
      %874 = vmatpush1.msra.mxu0 0.0
      %875 = vmatprep.subr.mxu0 0.0
      %876 = vmatpush1.msra.mxu0 0.0
      %877 = vmatprep.subr.mxu0 0.0
      %878 = vmatpush1.msra.mxu0 0.0
      %879 = vmatprep.subr.mxu0 0.0
      %880 = vmatpush1.msra.mxu0 0.0
      %881 = vmatprep.subr.mxu0 0.0
      %882 = vmatpush1.msra.mxu0 0.0
      %883 = vmatprep.subr.mxu0 0.0
      %884 = vmatpush1.msra.mxu0 0.0
      %885 = vmatprep.subr.mxu0 0.0
      %886 = vmatpush1.msra.mxu0 0.0
      %887 = vmatprep.subr.mxu0 0.0
      %888 = vmatpush1.msra.mxu0 0.0
      %889 = vmatprep.subr.mxu0 %v865
      %890 = vmatpush1.msra.mxu0 %v862
      %891 = vmatprep.subr.mxu0 %v855
      %892 = vmatpush1.msra.mxu0 %v854
      %893 = vmatprep.subr.mxu0 %v853
      %894 = vmatpush1.msra.mxu0 %v852
      %895 = vmatprep.subr.mxu0 %v851
      %896 = vmatpush1.msra.mxu0 %v850
      %897 = vmatprep.subr.mxu0 %v849
      %898 = vmatpush1.msra.mxu0 %v848
      %899 = vmatprep.subr.mxu0 0.0
      %900 = vmatpush2.msra.mxu0 0.0
      %901 = vmatprep.subr.mxu0 0.0
      %902 = vmatpush2.msra.mxu0 0.0
      %903 = vmatprep.subr.mxu0 0.0
      %904 = vmatpush2.msra.mxu0 0.0
      %905 = vmatprep.subr.mxu0 0.0
      %906 = vmatpush2.msra.mxu0 0.0
      %907 = vmatprep.subr.mxu0 0.0
      %908 = vmatpush2.msra.mxu0 0.0
      %909 = vmatprep.subr.mxu0 0.0
      %910 = vmatpush2.msra.mxu0 0.0
      %911 = vmatprep.subr.mxu0 0.0
      %912 = vmatpush2.msra.mxu0 0.0
      %913 = vmatprep.subr.mxu0 0.0
      %914 = vmatpush2.msra.mxu0 0.0
      %915 = vmatprep.subr.mxu0 0.0
      %916 = vmatpush2.msra.mxu0 0.0
      %917 = vmatprep.subr.mxu0 0.0
      %918 = vmatpush2.msra.mxu0 0.0
      %919 = vmatprep.subr.mxu0 0.0
      %920 = vmatpush2.msra.mxu0 0.0
      %921 = vmatprep.subr.mxu0 0.0
      %922 = vmatpush2.msra.mxu0 0.0
      %923 = vmatprep.subr.mxu0 0.0
      %924 = vmatpush2.msra.mxu0 0.0
      %925 = vmatprep.subr.mxu0 0.0
      %926 = vmatpush2.msra.mxu0 0.0
      %927 = vmatprep.subr.mxu0 0.0
      %928 = vmatpush2.msra.mxu0 0.0
      %929 = vmatprep.subr.mxu0 0.0
      %930 = vmatpush2.msra.mxu0 0.0
      %931 = vmatprep.mubr.f32.mxu0 0.0
      %932 = vmatmul.mubr.f32.gmra.mxu0 %v859
      %v933 = vpop.f32.mrf.mxu0
      %v934 = vadd.f32 0.0, %v933
      %v935 = vpop.f32.mrf.mxu0
      %v936 = vadd.f32 0.0, %v935
      %937 = vdwg.mxu0
      %v938 = vadd.f32 %v845, %v934
      %v939 = vadd.f32 %v846, %v936
      %v940 = vld [vmem:[%s367] sm:$0xff]
      %s941 = scalar_lea.vmem %s165, 320
      %v942 = vld [vmem:[%s941] sm:$0xff]
      %v943 = vld [vmem:[%s941 + $0x8] sm:$0xff]
      %v944 = vld [vmem:[%s941 + $0x10] sm:$0xff]
      %v945 = vld [vmem:[%s941 + $0x18] sm:$0xff]
      %v946 = vld [vmem:[%s941 + $0x20] sm:$0xff]
      %v947 = vld [vmem:[%s941 + $0x28] sm:$0xff]
      %v948 = vld [vmem:[%s941 + $0x30] sm:$0xff]
      %v949 = vld [vmem:[%s941 + $0x38] sm:$0xff]
      %v950 = vld [vmem:[%s941 + $0x40] sm:$0xf]
      %v951 = vld [vmem:[%s941 + $0x48] sm:$0xf]
      %v953 = vsel %vm188, %v940, 0
      %v956 = vsel %vm192, %v950, 0
      %v959 = vsel %vm192, %v951, 0
      %961 = vmatprep.subr.mxu0 0.0
      %962 = vmatpush1.msra.mxu0 0.0
      %963 = vmatprep.subr.mxu0 0.0
      %964 = vmatpush1.msra.mxu0 0.0
      %965 = vmatprep.subr.mxu0 0.0
      %966 = vmatpush1.msra.mxu0 0.0
      %967 = vmatprep.subr.mxu0 0.0
      %968 = vmatpush1.msra.mxu0 0.0
      %969 = vmatprep.subr.mxu0 0.0
      %970 = vmatpush1.msra.mxu0 0.0
      %971 = vmatprep.subr.mxu0 0.0
      %972 = vmatpush1.msra.mxu0 0.0
      %973 = vmatprep.subr.mxu0 0.0
      %974 = vmatpush1.msra.mxu0 0.0
      %975 = vmatprep.subr.mxu0 0.0
      %976 = vmatpush1.msra.mxu0 0.0
      %977 = vmatprep.subr.mxu0 0.0
      %978 = vmatpush1.msra.mxu0 0.0
      %979 = vmatprep.subr.mxu0 0.0
      %980 = vmatpush1.msra.mxu0 0.0
      %981 = vmatprep.subr.mxu0 0.0
      %982 = vmatpush1.msra.mxu0 0.0
      %983 = vmatprep.subr.mxu0 %v959
      %984 = vmatpush1.msra.mxu0 %v956
      %985 = vmatprep.subr.mxu0 %v949
      %986 = vmatpush1.msra.mxu0 %v948
      %987 = vmatprep.subr.mxu0 %v947
      %988 = vmatpush1.msra.mxu0 %v946
      %989 = vmatprep.subr.mxu0 %v945
      %990 = vmatpush1.msra.mxu0 %v944
      %991 = vmatprep.subr.mxu0 %v943
      %992 = vmatpush1.msra.mxu0 %v942
      %993 = vmatprep.subr.mxu0 0.0
      %994 = vmatpush2.msra.mxu0 0.0
      %995 = vmatprep.subr.mxu0 0.0
      %996 = vmatpush2.msra.mxu0 0.0
      %997 = vmatprep.subr.mxu0 0.0
      %998 = vmatpush2.msra.mxu0 0.0
      %999 = vmatprep.subr.mxu0 0.0
      %1000 = vmatpush2.msra.mxu0 0.0
      %1001 = vmatprep.subr.mxu0 0.0
      %1002 = vmatpush2.msra.mxu0 0.0
      %1003 = vmatprep.subr.mxu0 0.0
      %1004 = vmatpush2.msra.mxu0 0.0
      %1005 = vmatprep.subr.mxu0 0.0
      %1006 = vmatpush2.msra.mxu0 0.0
      %1007 = vmatprep.subr.mxu0 0.0
      %1008 = vmatpush2.msra.mxu0 0.0
      %1009 = vmatprep.subr.mxu0 0.0
      %1010 = vmatpush2.msra.mxu0 0.0
      %1011 = vmatprep.subr.mxu0 0.0
      %1012 = vmatpush2.msra.mxu0 0.0
      %1013 = vmatprep.subr.mxu0 0.0
      %1014 = vmatpush2.msra.mxu0 0.0
      %1015 = vmatprep.subr.mxu0 0.0
      %1016 = vmatpush2.msra.mxu0 0.0
      %1017 = vmatprep.subr.mxu0 0.0
      %1018 = vmatpush2.msra.mxu0 0.0
      %1019 = vmatprep.subr.mxu0 0.0
      %1020 = vmatpush2.msra.mxu0 0.0
      %1021 = vmatprep.subr.mxu0 0.0
      %1022 = vmatpush2.msra.mxu0 0.0
      %1023 = vmatprep.subr.mxu0 0.0
      %1024 = vmatpush2.msra.mxu0 0.0
      %1025 = vmatprep.mubr.f32.mxu0 0.0
      %1026 = vmatmul.mubr.f32.gmra.mxu0 %v953
      %v1027 = vpop.f32.mrf.mxu0
      %v1028 = vadd.f32 0.0, %v1027
      %v1029 = vpop.f32.mrf.mxu0
      %v1030 = vadd.f32 0.0, %v1029
      %1031 = vdwg.mxu0
      %v1032 = vadd.f32 %v938, %v1028
      %v1033 = vadd.f32 %v939, %v1030
      %v1034 = vmax.f32 %v1032, 0.0
      %v1035 = vmax.f32 %v1033, 0.0
      %v1036 = vmin.f32 %v1034, 6.0
      %v1037 = vmin.f32 %v1035, 6.0
      %1038 = vst [vmem:[%s170 + $0x20] sm:$0xff] %v1036
      %1039 = vst [vmem:[%s170 + $0x28] sm:$0xff] %v1037
      %v1040 = vld [vmem:[%s1] sm:$0xff]
      %v1041 = vld [vmem:[%s655] sm:$0xff]
      %v1042 = vld [vmem:[%s655 + $0x8] sm:$0xff]
      %v1043 = vld [vmem:[%s655 + $0x10] sm:$0xff]
      %v1044 = vld [vmem:[%s655 + $0x18] sm:$0xff]
      %v1045 = vld [vmem:[%s655 + $0x20] sm:$0xff]
      %v1046 = vld [vmem:[%s655 + $0x28] sm:$0xff]
      %v1047 = vld [vmem:[%s655 + $0x30] sm:$0xff]
      %v1048 = vld [vmem:[%s655 + $0x38] sm:$0xff]
      %v1049 = vld [vmem:[%s655 + $0x40] sm:$0xf]
      %v1050 = vld [vmem:[%s655 + $0x48] sm:$0xf]
      %v1052 = vsel %vm188, %v1040, 0
      %v1055 = vsel %vm192, %v1049, 0
      %v1058 = vsel %vm192, %v1050, 0
      %1060 = vmatprep.subr.mxu0 0.0
      %1061 = vmatpush1.msra.mxu0 0.0
      %1062 = vmatprep.subr.mxu0 0.0
      %1063 = vmatpush1.msra.mxu0 0.0
      %1064 = vmatprep.subr.mxu0 0.0
      %1065 = vmatpush1.msra.mxu0 0.0
      %1066 = vmatprep.subr.mxu0 0.0
      %1067 = vmatpush1.msra.mxu0 0.0
      %1068 = vmatprep.subr.mxu0 0.0
      %1069 = vmatpush1.msra.mxu0 0.0
      %1070 = vmatprep.subr.mxu0 0.0
      %1071 = vmatpush1.msra.mxu0 0.0
      %1072 = vmatprep.subr.mxu0 0.0
      %1073 = vmatpush1.msra.mxu0 0.0
      %1074 = vmatprep.subr.mxu0 0.0
      %1075 = vmatpush1.msra.mxu0 0.0
      %1076 = vmatprep.subr.mxu0 0.0
      %1077 = vmatpush1.msra.mxu0 0.0
      %1078 = vmatprep.subr.mxu0 0.0
      %1079 = vmatpush1.msra.mxu0 0.0
      %1080 = vmatprep.subr.mxu0 0.0
      %1081 = vmatpush1.msra.mxu0 0.0
      %1082 = vmatprep.subr.mxu0 %v1058
      %1083 = vmatpush1.msra.mxu0 %v1055
      %1084 = vmatprep.subr.mxu0 %v1048
      %1085 = vmatpush1.msra.mxu0 %v1047
      %1086 = vmatprep.subr.mxu0 %v1046
      %1087 = vmatpush1.msra.mxu0 %v1045
      %1088 = vmatprep.subr.mxu0 %v1044
      %1089 = vmatpush1.msra.mxu0 %v1043
      %1090 = vmatprep.subr.mxu0 %v1042
      %1091 = vmatpush1.msra.mxu0 %v1041
      %1092 = vmatprep.subr.mxu0 0.0
      %1093 = vmatpush2.msra.mxu0 0.0
      %1094 = vmatprep.subr.mxu0 0.0
      %1095 = vmatpush2.msra.mxu0 0.0
      %1096 = vmatprep.subr.mxu0 0.0
      %1097 = vmatpush2.msra.mxu0 0.0
      %1098 = vmatprep.subr.mxu0 0.0
      %1099 = vmatpush2.msra.mxu0 0.0
      %1100 = vmatprep.subr.mxu0 0.0
      %1101 = vmatpush2.msra.mxu0 0.0
      %1102 = vmatprep.subr.mxu0 0.0
      %1103 = vmatpush2.msra.mxu0 0.0
      %1104 = vmatprep.subr.mxu0 0.0
      %1105 = vmatpush2.msra.mxu0 0.0
      %1106 = vmatprep.subr.mxu0 0.0
      %1107 = vmatpush2.msra.mxu0 0.0
      %1108 = vmatprep.subr.mxu0 0.0
      %1109 = vmatpush2.msra.mxu0 0.0
      %1110 = vmatprep.subr.mxu0 0.0
      %1111 = vmatpush2.msra.mxu0 0.0
      %1112 = vmatprep.subr.mxu0 0.0
      %1113 = vmatpush2.msra.mxu0 0.0
      %1114 = vmatprep.subr.mxu0 0.0
      %1115 = vmatpush2.msra.mxu0 0.0
      %1116 = vmatprep.subr.mxu0 0.0
      %1117 = vmatpush2.msra.mxu0 0.0
      %1118 = vmatprep.subr.mxu0 0.0
      %1119 = vmatpush2.msra.mxu0 0.0
      %1120 = vmatprep.subr.mxu0 0.0
      %1121 = vmatpush2.msra.mxu0 0.0
      %1122 = vmatprep.subr.mxu0 0.0
      %1123 = vmatpush2.msra.mxu0 0.0
      %1124 = vmatprep.mubr.f32.mxu0 0.0
      %1125 = vmatmul.mubr.f32.gmra.mxu0 %v1052
      %v1126 = vpop.f32.mrf.mxu0
      %v1127 = vadd.f32 0.0, %v1126
      %v1128 = vpop.f32.mrf.mxu0
      %v1129 = vadd.f32 0.0, %v1128
      %1130 = vdwg.mxu0
      %v1131 = vadd.f32 %v175, %v1127
      %v1132 = vadd.f32 %v175, %v1129
      %v1133 = vld [vmem:[%s272] sm:$0xff]
      %v1134 = vld [vmem:[%s941] sm:$0xff]
      %v1135 = vld [vmem:[%s941 + $0x8] sm:$0xff]
      %v1136 = vld [vmem:[%s941 + $0x10] sm:$0xff]
      %v1137 = vld [vmem:[%s941 + $0x18] sm:$0xff]
      %v1138 = vld [vmem:[%s941 + $0x20] sm:$0xff]
      %v1139 = vld [vmem:[%s941 + $0x28] sm:$0xff]
      %v1140 = vld [vmem:[%s941 + $0x30] sm:$0xff]
      %v1141 = vld [vmem:[%s941 + $0x38] sm:$0xff]
      %v1142 = vld [vmem:[%s941 + $0x40] sm:$0xf]
      %v1143 = vld [vmem:[%s941 + $0x48] sm:$0xf]
      %v1145 = vsel %vm188, %v1133, 0
      %v1148 = vsel %vm192, %v1142, 0
      %v1151 = vsel %vm192, %v1143, 0
      %1153 = vmatprep.subr.mxu0 0.0
      %1154 = vmatpush1.msra.mxu0 0.0
      %1155 = vmatprep.subr.mxu0 0.0
      %1156 = vmatpush1.msra.mxu0 0.0
      %1157 = vmatprep.subr.mxu0 0.0
      %1158 = vmatpush1.msra.mxu0 0.0
      %1159 = vmatprep.subr.mxu0 0.0
      %1160 = vmatpush1.msra.mxu0 0.0
      %1161 = vmatprep.subr.mxu0 0.0
      %1162 = vmatpush1.msra.mxu0 0.0
      %1163 = vmatprep.subr.mxu0 0.0
      %1164 = vmatpush1.msra.mxu0 0.0
      %1165 = vmatprep.subr.mxu0 0.0
      %1166 = vmatpush1.msra.mxu0 0.0
      %1167 = vmatprep.subr.mxu0 0.0
      %1168 = vmatpush1.msra.mxu0 0.0
      %1169 = vmatprep.subr.mxu0 0.0
      %1170 = vmatpush1.msra.mxu0 0.0
      %1171 = vmatprep.subr.mxu0 0.0
      %1172 = vmatpush1.msra.mxu0 0.0
      %1173 = vmatprep.subr.mxu0 0.0
      %1174 = vmatpush1.msra.mxu0 0.0
      %1175 = vmatprep.subr.mxu0 %v1151
      %1176 = vmatpush1.msra.mxu0 %v1148
      %1177 = vmatprep.subr.mxu0 %v1141
      %1178 = vmatpush1.msra.mxu0 %v1140
      %1179 = vmatprep.subr.mxu0 %v1139
      %1180 = vmatpush1.msra.mxu0 %v1138
      %1181 = vmatprep.subr.mxu0 %v1137
      %1182 = vmatpush1.msra.mxu0 %v1136
      %1183 = vmatprep.subr.mxu0 %v1135
      %1184 = vmatpush1.msra.mxu0 %v1134
      %1185 = vmatprep.subr.mxu0 0.0
      %1186 = vmatpush2.msra.mxu0 0.0
      %1187 = vmatprep.subr.mxu0 0.0
      %1188 = vmatpush2.msra.mxu0 0.0
      %1189 = vmatprep.subr.mxu0 0.0
      %1190 = vmatpush2.msra.mxu0 0.0
      %1191 = vmatprep.subr.mxu0 0.0
      %1192 = vmatpush2.msra.mxu0 0.0
      %1193 = vmatprep.subr.mxu0 0.0
      %1194 = vmatpush2.msra.mxu0 0.0
      %1195 = vmatprep.subr.mxu0 0.0
      %1196 = vmatpush2.msra.mxu0 0.0
      %1197 = vmatprep.subr.mxu0 0.0
      %1198 = vmatpush2.msra.mxu0 0.0
      %1199 = vmatprep.subr.mxu0 0.0
      %1200 = vmatpush2.msra.mxu0 0.0
      %1201 = vmatprep.subr.mxu0 0.0
      %1202 = vmatpush2.msra.mxu0 0.0
      %1203 = vmatprep.subr.mxu0 0.0
      %1204 = vmatpush2.msra.mxu0 0.0
      %1205 = vmatprep.subr.mxu0 0.0
      %1206 = vmatpush2.msra.mxu0 0.0
      %1207 = vmatprep.subr.mxu0 0.0
      %1208 = vmatpush2.msra.mxu0 0.0
      %1209 = vmatprep.subr.mxu0 0.0
      %1210 = vmatpush2.msra.mxu0 0.0
      %1211 = vmatprep.subr.mxu0 0.0
      %1212 = vmatpush2.msra.mxu0 0.0
      %1213 = vmatprep.subr.mxu0 0.0
      %1214 = vmatpush2.msra.mxu0 0.0
      %1215 = vmatprep.subr.mxu0 0.0
      %1216 = vmatpush2.msra.mxu0 0.0
      %1217 = vmatprep.mubr.f32.mxu0 0.0
      %1218 = vmatmul.mubr.f32.gmra.mxu0 %v1145
      %v1219 = vpop.f32.mrf.mxu0
      %v1220 = vadd.f32 0.0, %v1219
      %v1221 = vpop.f32.mrf.mxu0
      %v1222 = vadd.f32 0.0, %v1221
      %1223 = vdwg.mxu0
      %v1224 = vadd.f32 %v1131, %v1220
      %v1225 = vadd.f32 %v1132, %v1222
      %v1226 = vld [vmem:[%s367] sm:$0xff]
      %s1227 = scalar_lea.vmem %s165, 400
      %v1228 = vld [vmem:[%s1227] sm:$0xff]
      %v1229 = vld [vmem:[%s1227 + $0x8] sm:$0xff]
      %v1230 = vld [vmem:[%s1227 + $0x10] sm:$0xff]
      %v1231 = vld [vmem:[%s1227 + $0x18] sm:$0xff]
      %v1232 = vld [vmem:[%s1227 + $0x20] sm:$0xff]
      %v1233 = vld [vmem:[%s1227 + $0x28] sm:$0xff]
      %v1234 = vld [vmem:[%s1227 + $0x30] sm:$0xff]
      %v1235 = vld [vmem:[%s1227 + $0x38] sm:$0xff]
      %v1236 = vld [vmem:[%s1227 + $0x40] sm:$0xf]
      %v1237 = vld [vmem:[%s1227 + $0x48] sm:$0xf]
      %v1239 = vsel %vm188, %v1226, 0
      %v1242 = vsel %vm192, %v1236, 0
      %v1245 = vsel %vm192, %v1237, 0
      %1247 = vmatprep.subr.mxu0 0.0
      %1248 = vmatpush1.msra.mxu0 0.0
      %1249 = vmatprep.subr.mxu0 0.0
      %1250 = vmatpush1.msra.mxu0 0.0
      %1251 = vmatprep.subr.mxu0 0.0
      %1252 = vmatpush1.msra.mxu0 0.0
      %1253 = vmatprep.subr.mxu0 0.0
      %1254 = vmatpush1.msra.mxu0 0.0
      %1255 = vmatprep.subr.mxu0 0.0
      %1256 = vmatpush1.msra.mxu0 0.0
      %1257 = vmatprep.subr.mxu0 0.0
      %1258 = vmatpush1.msra.mxu0 0.0
      %1259 = vmatprep.subr.mxu0 0.0
      %1260 = vmatpush1.msra.mxu0 0.0
      %1261 = vmatprep.subr.mxu0 0.0
      %1262 = vmatpush1.msra.mxu0 0.0
      %1263 = vmatprep.subr.mxu0 0.0
      %1264 = vmatpush1.msra.mxu0 0.0
      %1265 = vmatprep.subr.mxu0 0.0
      %1266 = vmatpush1.msra.mxu0 0.0
      %1267 = vmatprep.subr.mxu0 0.0
      %1268 = vmatpush1.msra.mxu0 0.0
      %1269 = vmatprep.subr.mxu0 %v1245
      %1270 = vmatpush1.msra.mxu0 %v1242
      %1271 = vmatprep.subr.mxu0 %v1235
      %1272 = vmatpush1.msra.mxu0 %v1234
      %1273 = vmatprep.subr.mxu0 %v1233
      %1274 = vmatpush1.msra.mxu0 %v1232
      %1275 = vmatprep.subr.mxu0 %v1231
      %1276 = vmatpush1.msra.mxu0 %v1230
      %1277 = vmatprep.subr.mxu0 %v1229
      %1278 = vmatpush1.msra.mxu0 %v1228
      %1279 = vmatprep.subr.mxu0 0.0
      %1280 = vmatpush2.msra.mxu0 0.0
      %1281 = vmatprep.subr.mxu0 0.0
      %1282 = vmatpush2.msra.mxu0 0.0
      %1283 = vmatprep.subr.mxu0 0.0
      %1284 = vmatpush2.msra.mxu0 0.0
      %1285 = vmatprep.subr.mxu0 0.0
      %1286 = vmatpush2.msra.mxu0 0.0
      %1287 = vmatprep.subr.mxu0 0.0
      %1288 = vmatpush2.msra.mxu0 0.0
      %1289 = vmatprep.subr.mxu0 0.0
      %1290 = vmatpush2.msra.mxu0 0.0
      %1291 = vmatprep.subr.mxu0 0.0
      %1292 = vmatpush2.msra.mxu0 0.0
      %1293 = vmatprep.subr.mxu0 0.0
      %1294 = vmatpush2.msra.mxu0 0.0
      %1295 = vmatprep.subr.mxu0 0.0
      %1296 = vmatpush2.msra.mxu0 0.0
      %1297 = vmatprep.subr.mxu0 0.0
      %1298 = vmatpush2.msra.mxu0 0.0
      %1299 = vmatprep.subr.mxu0 0.0
      %1300 = vmatpush2.msra.mxu0 0.0
      %1301 = vmatprep.subr.mxu0 0.0
      %1302 = vmatpush2.msra.mxu0 0.0
      %1303 = vmatprep.subr.mxu0 0.0
      %1304 = vmatpush2.msra.mxu0 0.0
      %1305 = vmatprep.subr.mxu0 0.0
      %1306 = vmatpush2.msra.mxu0 0.0
      %1307 = vmatprep.subr.mxu0 0.0
      %1308 = vmatpush2.msra.mxu0 0.0
      %1309 = vmatprep.subr.mxu0 0.0
      %1310 = vmatpush2.msra.mxu0 0.0
      %1311 = vmatprep.mubr.f32.mxu0 0.0
      %1312 = vmatmul.mubr.f32.gmra.mxu0 %v1239
      %v1313 = vpop.f32.mrf.mxu0
      %v1314 = vadd.f32 0.0, %v1313
      %v1315 = vpop.f32.mrf.mxu0
      %v1316 = vadd.f32 0.0, %v1315
      %1317 = vdwg.mxu0
      %v1318 = vadd.f32 %v1224, %v1314
      %v1319 = vadd.f32 %v1225, %v1316
      %v1320 = vmax.f32 %v1318, 0.0
      %v1321 = vmax.f32 %v1319, 0.0
      %v1322 = vmin.f32 %v1320, 6.0
      %v1323 = vmin.f32 %v1321, 6.0
      %1324 = vst [vmem:[%s170 + $0x30] sm:$0xff] %v1322
      %1325 = vst [vmem:[%s170 + $0x38] sm:$0xff] %v1323
      %v1326 = vld [vmem:[%s1] sm:$0xff]
      %v1327 = vld [vmem:[%s941] sm:$0xff]
      %v1328 = vld [vmem:[%s941 + $0x8] sm:$0xff]
      %v1329 = vld [vmem:[%s941 + $0x10] sm:$0xff]
      %v1330 = vld [vmem:[%s941 + $0x18] sm:$0xff]
      %v1331 = vld [vmem:[%s941 + $0x20] sm:$0xff]
      %v1332 = vld [vmem:[%s941 + $0x28] sm:$0xff]
      %v1333 = vld [vmem:[%s941 + $0x30] sm:$0xff]
      %v1334 = vld [vmem:[%s941 + $0x38] sm:$0xff]
      %v1335 = vld [vmem:[%s941 + $0x40] sm:$0xf]
      %v1336 = vld [vmem:[%s941 + $0x48] sm:$0xf]
      %v1338 = vsel %vm188, %v1326, 0
      %v1341 = vsel %vm192, %v1335, 0
      %v1344 = vsel %vm192, %v1336, 0
      %1346 = vmatprep.subr.mxu0 0.0
      %1347 = vmatpush1.msra.mxu0 0.0
      %1348 = vmatprep.subr.mxu0 0.0
      %1349 = vmatpush1.msra.mxu0 0.0
      %1350 = vmatprep.subr.mxu0 0.0
      %1351 = vmatpush1.msra.mxu0 0.0
      %1352 = vmatprep.subr.mxu0 0.0
      %1353 = vmatpush1.msra.mxu0 0.0
      %1354 = vmatprep.subr.mxu0 0.0
      %1355 = vmatpush1.msra.mxu0 0.0
      %1356 = vmatprep.subr.mxu0 0.0
      %1357 = vmatpush1.msra.mxu0 0.0
      %1358 = vmatprep.subr.mxu0 0.0
      %1359 = vmatpush1.msra.mxu0 0.0
      %1360 = vmatprep.subr.mxu0 0.0
      %1361 = vmatpush1.msra.mxu0 0.0
      %1362 = vmatprep.subr.mxu0 0.0
      %1363 = vmatpush1.msra.mxu0 0.0
      %1364 = vmatprep.subr.mxu0 0.0
      %1365 = vmatpush1.msra.mxu0 0.0
      %1366 = vmatprep.subr.mxu0 0.0
      %1367 = vmatpush1.msra.mxu0 0.0
      %1368 = vmatprep.subr.mxu0 %v1344
      %1369 = vmatpush1.msra.mxu0 %v1341
      %1370 = vmatprep.subr.mxu0 %v1334
      %1371 = vmatpush1.msra.mxu0 %v1333
      %1372 = vmatprep.subr.mxu0 %v1332
      %1373 = vmatpush1.msra.mxu0 %v1331
      %1374 = vmatprep.subr.mxu0 %v1330
      %1375 = vmatpush1.msra.mxu0 %v1329
      %1376 = vmatprep.subr.mxu0 %v1328
      %1377 = vmatpush1.msra.mxu0 %v1327
      %1378 = vmatprep.subr.mxu0 0.0
      %1379 = vmatpush2.msra.mxu0 0.0
      %1380 = vmatprep.subr.mxu0 0.0
      %1381 = vmatpush2.msra.mxu0 0.0
      %1382 = vmatprep.subr.mxu0 0.0
      %1383 = vmatpush2.msra.mxu0 0.0
      %1384 = vmatprep.subr.mxu0 0.0
      %1385 = vmatpush2.msra.mxu0 0.0
      %1386 = vmatprep.subr.mxu0 0.0
      %1387 = vmatpush2.msra.mxu0 0.0
      %1388 = vmatprep.subr.mxu0 0.0
      %1389 = vmatpush2.msra.mxu0 0.0
      %1390 = vmatprep.subr.mxu0 0.0
      %1391 = vmatpush2.msra.mxu0 0.0
      %1392 = vmatprep.subr.mxu0 0.0
      %1393 = vmatpush2.msra.mxu0 0.0
      %1394 = vmatprep.subr.mxu0 0.0
      %1395 = vmatpush2.msra.mxu0 0.0
      %1396 = vmatprep.subr.mxu0 0.0
      %1397 = vmatpush2.msra.mxu0 0.0
      %1398 = vmatprep.subr.mxu0 0.0
      %1399 = vmatpush2.msra.mxu0 0.0
      %1400 = vmatprep.subr.mxu0 0.0
      %1401 = vmatpush2.msra.mxu0 0.0
      %1402 = vmatprep.subr.mxu0 0.0
      %1403 = vmatpush2.msra.mxu0 0.0
      %1404 = vmatprep.subr.mxu0 0.0
      %1405 = vmatpush2.msra.mxu0 0.0
      %1406 = vmatprep.subr.mxu0 0.0
      %1407 = vmatpush2.msra.mxu0 0.0
      %1408 = vmatprep.subr.mxu0 0.0
      %1409 = vmatpush2.msra.mxu0 0.0
      %1410 = vmatprep.mubr.f32.mxu0 0.0
      %1411 = vmatmul.mubr.f32.gmra.mxu0 %v1338
      %v1412 = vpop.f32.mrf.mxu0
      %v1413 = vadd.f32 0.0, %v1412
      %v1414 = vpop.f32.mrf.mxu0
      %v1415 = vadd.f32 0.0, %v1414
      %1416 = vdwg.mxu0
      %v1417 = vadd.f32 %v175, %v1413
      %v1418 = vadd.f32 %v175, %v1415
      %v1419 = vld [vmem:[%s272] sm:$0xff]
      %v1420 = vld [vmem:[%s1227] sm:$0xff]
      %v1421 = vld [vmem:[%s1227 + $0x8] sm:$0xff]
      %v1422 = vld [vmem:[%s1227 + $0x10] sm:$0xff]
      %v1423 = vld [vmem:[%s1227 + $0x18] sm:$0xff]
      %v1424 = vld [vmem:[%s1227 + $0x20] sm:$0xff]
      %v1425 = vld [vmem:[%s1227 + $0x28] sm:$0xff]
      %v1426 = vld [vmem:[%s1227 + $0x30] sm:$0xff]
      %v1427 = vld [vmem:[%s1227 + $0x38] sm:$0xff]
      %v1428 = vld [vmem:[%s1227 + $0x40] sm:$0xf]
      %v1429 = vld [vmem:[%s1227 + $0x48] sm:$0xf]
      %v1431 = vsel %vm188, %v1419, 0
      %v1434 = vsel %vm192, %v1428, 0
      %v1437 = vsel %vm192, %v1429, 0
      %1439 = vmatprep.subr.mxu0 0.0
      %1440 = vmatpush1.msra.mxu0 0.0
      %1441 = vmatprep.subr.mxu0 0.0
      %1442 = vmatpush1.msra.mxu0 0.0
      %1443 = vmatprep.subr.mxu0 0.0
      %1444 = vmatpush1.msra.mxu0 0.0
      %1445 = vmatprep.subr.mxu0 0.0
      %1446 = vmatpush1.msra.mxu0 0.0
      %1447 = vmatprep.subr.mxu0 0.0
      %1448 = vmatpush1.msra.mxu0 0.0
      %1449 = vmatprep.subr.mxu0 0.0
      %1450 = vmatpush1.msra.mxu0 0.0
      %1451 = vmatprep.subr.mxu0 0.0
      %1452 = vmatpush1.msra.mxu0 0.0
      %1453 = vmatprep.subr.mxu0 0.0
      %1454 = vmatpush1.msra.mxu0 0.0
      %1455 = vmatprep.subr.mxu0 0.0
      %1456 = vmatpush1.msra.mxu0 0.0
      %1457 = vmatprep.subr.mxu0 0.0
      %1458 = vmatpush1.msra.mxu0 0.0
      %1459 = vmatprep.subr.mxu0 0.0
      %1460 = vmatpush1.msra.mxu0 0.0
      %1461 = vmatprep.subr.mxu0 %v1437
      %1462 = vmatpush1.msra.mxu0 %v1434
      %1463 = vmatprep.subr.mxu0 %v1427
      %1464 = vmatpush1.msra.mxu0 %v1426
      %1465 = vmatprep.subr.mxu0 %v1425
      %1466 = vmatpush1.msra.mxu0 %v1424
      %1467 = vmatprep.subr.mxu0 %v1423
      %1468 = vmatpush1.msra.mxu0 %v1422
      %1469 = vmatprep.subr.mxu0 %v1421
      %1470 = vmatpush1.msra.mxu0 %v1420
      %1471 = vmatprep.subr.mxu0 0.0
      %1472 = vmatpush2.msra.mxu0 0.0
      %1473 = vmatprep.subr.mxu0 0.0
      %1474 = vmatpush2.msra.mxu0 0.0
      %1475 = vmatprep.subr.mxu0 0.0
      %1476 = vmatpush2.msra.mxu0 0.0
      %1477 = vmatprep.subr.mxu0 0.0
      %1478 = vmatpush2.msra.mxu0 0.0
      %1479 = vmatprep.subr.mxu0 0.0
      %1480 = vmatpush2.msra.mxu0 0.0
      %1481 = vmatprep.subr.mxu0 0.0
      %1482 = vmatpush2.msra.mxu0 0.0
      %1483 = vmatprep.subr.mxu0 0.0
      %1484 = vmatpush2.msra.mxu0 0.0
      %1485 = vmatprep.subr.mxu0 0.0
      %1486 = vmatpush2.msra.mxu0 0.0
      %1487 = vmatprep.subr.mxu0 0.0
      %1488 = vmatpush2.msra.mxu0 0.0
      %1489 = vmatprep.subr.mxu0 0.0
      %1490 = vmatpush2.msra.mxu0 0.0
      %1491 = vmatprep.subr.mxu0 0.0
      %1492 = vmatpush2.msra.mxu0 0.0
      %1493 = vmatprep.subr.mxu0 0.0
      %1494 = vmatpush2.msra.mxu0 0.0
      %1495 = vmatprep.subr.mxu0 0.0
      %1496 = vmatpush2.msra.mxu0 0.0
      %1497 = vmatprep.subr.mxu0 0.0
      %1498 = vmatpush2.msra.mxu0 0.0
      %1499 = vmatprep.subr.mxu0 0.0
      %1500 = vmatpush2.msra.mxu0 0.0
      %1501 = vmatprep.subr.mxu0 0.0
      %1502 = vmatpush2.msra.mxu0 0.0
      %1503 = vmatprep.mubr.f32.mxu0 0.0
      %1504 = vmatmul.mubr.f32.gmra.mxu0 %v1431
      %v1505 = vpop.f32.mrf.mxu0
      %v1506 = vadd.f32 0.0, %v1505
      %v1507 = vpop.f32.mrf.mxu0
      %v1508 = vadd.f32 0.0, %v1507
      %1509 = vdwg.mxu0
      %v1510 = vadd.f32 %v1417, %v1506
      %v1511 = vadd.f32 %v1418, %v1508
      %v1512 = vld [vmem:[%s367] sm:$0xff]
      %s1513 = scalar_lea.vmem %s165, 480
      %v1514 = vld [vmem:[%s1513] sm:$0xff]
      %v1515 = vld [vmem:[%s1513 + $0x8] sm:$0xff]
      %v1516 = vld [vmem:[%s1513 + $0x10] sm:$0xff]
      %v1517 = vld [vmem:[%s1513 + $0x18] sm:$0xff]
      %v1518 = vld [vmem:[%s1513 + $0x20] sm:$0xff]
      %v1519 = vld [vmem:[%s1513 + $0x28] sm:$0xff]
      %v1520 = vld [vmem:[%s1513 + $0x30] sm:$0xff]
      %v1521 = vld [vmem:[%s1513 + $0x38] sm:$0xff]
      %v1522 = vld [vmem:[%s1513 + $0x40] sm:$0xf]
      %v1523 = vld [vmem:[%s1513 + $0x48] sm:$0xf]
      %v1525 = vsel %vm188, %v1512, 0
      %v1528 = vsel %vm192, %v1522, 0
      %v1531 = vsel %vm192, %v1523, 0
      %1533 = vmatprep.subr.mxu0 0.0
      %1534 = vmatpush1.msra.mxu0 0.0
      %1535 = vmatprep.subr.mxu0 0.0
      %1536 = vmatpush1.msra.mxu0 0.0
      %1537 = vmatprep.subr.mxu0 0.0
      %1538 = vmatpush1.msra.mxu0 0.0
      %1539 = vmatprep.subr.mxu0 0.0
      %1540 = vmatpush1.msra.mxu0 0.0
      %1541 = vmatprep.subr.mxu0 0.0
      %1542 = vmatpush1.msra.mxu0 0.0
      %1543 = vmatprep.subr.mxu0 0.0
      %1544 = vmatpush1.msra.mxu0 0.0
      %1545 = vmatprep.subr.mxu0 0.0
      %1546 = vmatpush1.msra.mxu0 0.0
      %1547 = vmatprep.subr.mxu0 0.0
      %1548 = vmatpush1.msra.mxu0 0.0
      %1549 = vmatprep.subr.mxu0 0.0
      %1550 = vmatpush1.msra.mxu0 0.0
      %1551 = vmatprep.subr.mxu0 0.0
      %1552 = vmatpush1.msra.mxu0 0.0
      %1553 = vmatprep.subr.mxu0 0.0
      %1554 = vmatpush1.msra.mxu0 0.0
      %1555 = vmatprep.subr.mxu0 %v1531
      %1556 = vmatpush1.msra.mxu0 %v1528
      %1557 = vmatprep.subr.mxu0 %v1521
      %1558 = vmatpush1.msra.mxu0 %v1520
      %1559 = vmatprep.subr.mxu0 %v1519
      %1560 = vmatpush1.msra.mxu0 %v1518
      %1561 = vmatprep.subr.mxu0 %v1517
      %1562 = vmatpush1.msra.mxu0 %v1516
      %1563 = vmatprep.subr.mxu0 %v1515
      %1564 = vmatpush1.msra.mxu0 %v1514
      %1565 = vmatprep.subr.mxu0 0.0
      %1566 = vmatpush2.msra.mxu0 0.0
      %1567 = vmatprep.subr.mxu0 0.0
      %1568 = vmatpush2.msra.mxu0 0.0
      %1569 = vmatprep.subr.mxu0 0.0
      %1570 = vmatpush2.msra.mxu0 0.0
      %1571 = vmatprep.subr.mxu0 0.0
      %1572 = vmatpush2.msra.mxu0 0.0
      %1573 = vmatprep.subr.mxu0 0.0
      %1574 = vmatpush2.msra.mxu0 0.0
      %1575 = vmatprep.subr.mxu0 0.0
      %1576 = vmatpush2.msra.mxu0 0.0
      %1577 = vmatprep.subr.mxu0 0.0
      %1578 = vmatpush2.msra.mxu0 0.0
      %1579 = vmatprep.subr.mxu0 0.0
      %1580 = vmatpush2.msra.mxu0 0.0
      %1581 = vmatprep.subr.mxu0 0.0
      %1582 = vmatpush2.msra.mxu0 0.0
      %1583 = vmatprep.subr.mxu0 0.0
      %1584 = vmatpush2.msra.mxu0 0.0
      %1585 = vmatprep.subr.mxu0 0.0
      %1586 = vmatpush2.msra.mxu0 0.0
      %1587 = vmatprep.subr.mxu0 0.0
      %1588 = vmatpush2.msra.mxu0 0.0
      %1589 = vmatprep.subr.mxu0 0.0
      %1590 = vmatpush2.msra.mxu0 0.0
      %1591 = vmatprep.subr.mxu0 0.0
      %1592 = vmatpush2.msra.mxu0 0.0
      %1593 = vmatprep.subr.mxu0 0.0
      %1594 = vmatpush2.msra.mxu0 0.0
      %1595 = vmatprep.subr.mxu0 0.0
      %1596 = vmatpush2.msra.mxu0 0.0
      %1597 = vmatprep.mubr.f32.mxu0 0.0
      %1598 = vmatmul.mubr.f32.gmra.mxu0 %v1525
      %v1599 = vpop.f32.mrf.mxu0
      %v1600 = vadd.f32 0.0, %v1599
      %v1601 = vpop.f32.mrf.mxu0
      %v1602 = vadd.f32 0.0, %v1601
      %1603 = vdwg.mxu0
      %v1604 = vadd.f32 %v1510, %v1600
      %v1605 = vadd.f32 %v1511, %v1602
      %v1606 = vmax.f32 %v1604, 0.0
      %v1607 = vmax.f32 %v1605, 0.0
      %v1608 = vmin.f32 %v1606, 6.0
      %v1609 = vmin.f32 %v1607, 6.0
      %1610 = vst [vmem:[%s170 + $0x40] sm:$0xff] %v1608
      %1611 = vst [vmem:[%s170 + $0x48] sm:$0xff] %v1609
      %v1612 = vld [vmem:[%s1] sm:$0xff]
      %v1613 = vld [vmem:[%s1227] sm:$0xff]
      %v1614 = vld [vmem:[%s1227 + $0x8] sm:$0xff]
      %v1615 = vld [vmem:[%s1227 + $0x10] sm:$0xff]
      %v1616 = vld [vmem:[%s1227 + $0x18] sm:$0xff]
      %v1617 = vld [vmem:[%s1227 + $0x20] sm:$0xff]
      %v1618 = vld [vmem:[%s1227 + $0x28] sm:$0xff]
      %v1619 = vld [vmem:[%s1227 + $0x30] sm:$0xff]
      %v1620 = vld [vmem:[%s1227 + $0x38] sm:$0xff]
      %v1621 = vld [vmem:[%s1227 + $0x40] sm:$0xf]
      %v1622 = vld [vmem:[%s1227 + $0x48] sm:$0xf]
      %v1624 = vsel %vm188, %v1612, 0
      %v1627 = vsel %vm192, %v1621, 0
      %v1630 = vsel %vm192, %v1622, 0
      %1632 = vmatprep.subr.mxu0 0.0
      %1633 = vmatpush1.msra.mxu0 0.0
      %1634 = vmatprep.subr.mxu0 0.0
      %1635 = vmatpush1.msra.mxu0 0.0
      %1636 = vmatprep.subr.mxu0 0.0
      %1637 = vmatpush1.msra.mxu0 0.0
      %1638 = vmatprep.subr.mxu0 0.0
      %1639 = vmatpush1.msra.mxu0 0.0
      %1640 = vmatprep.subr.mxu0 0.0
      %1641 = vmatpush1.msra.mxu0 0.0
      %1642 = vmatprep.subr.mxu0 0.0
      %1643 = vmatpush1.msra.mxu0 0.0
      %1644 = vmatprep.subr.mxu0 0.0
      %1645 = vmatpush1.msra.mxu0 0.0
      %1646 = vmatprep.subr.mxu0 0.0
      %1647 = vmatpush1.msra.mxu0 0.0
      %1648 = vmatprep.subr.mxu0 0.0
      %1649 = vmatpush1.msra.mxu0 0.0
      %1650 = vmatprep.subr.mxu0 0.0
      %1651 = vmatpush1.msra.mxu0 0.0
      %1652 = vmatprep.subr.mxu0 0.0
      %1653 = vmatpush1.msra.mxu0 0.0
      %1654 = vmatprep.subr.mxu0 %v1630
      %1655 = vmatpush1.msra.mxu0 %v1627
      %1656 = vmatprep.subr.mxu0 %v1620
      %1657 = vmatpush1.msra.mxu0 %v1619
      %1658 = vmatprep.subr.mxu0 %v1618
      %1659 = vmatpush1.msra.mxu0 %v1617
      %1660 = vmatprep.subr.mxu0 %v1616
      %1661 = vmatpush1.msra.mxu0 %v1615
      %1662 = vmatprep.subr.mxu0 %v1614
      %1663 = vmatpush1.msra.mxu0 %v1613
      %1664 = vmatprep.subr.mxu0 0.0
      %1665 = vmatpush2.msra.mxu0 0.0
      %1666 = vmatprep.subr.mxu0 0.0
      %1667 = vmatpush2.msra.mxu0 0.0
      %1668 = vmatprep.subr.mxu0 0.0
      %1669 = vmatpush2.msra.mxu0 0.0
      %1670 = vmatprep.subr.mxu0 0.0
      %1671 = vmatpush2.msra.mxu0 0.0
      %1672 = vmatprep.subr.mxu0 0.0
      %1673 = vmatpush2.msra.mxu0 0.0
      %1674 = vmatprep.subr.mxu0 0.0
      %1675 = vmatpush2.msra.mxu0 0.0
      %1676 = vmatprep.subr.mxu0 0.0
      %1677 = vmatpush2.msra.mxu0 0.0
      %1678 = vmatprep.subr.mxu0 0.0
      %1679 = vmatpush2.msra.mxu0 0.0
      %1680 = vmatprep.subr.mxu0 0.0
      %1681 = vmatpush2.msra.mxu0 0.0
      %1682 = vmatprep.subr.mxu0 0.0
      %1683 = vmatpush2.msra.mxu0 0.0
      %1684 = vmatprep.subr.mxu0 0.0
      %1685 = vmatpush2.msra.mxu0 0.0
      %1686 = vmatprep.subr.mxu0 0.0
      %1687 = vmatpush2.msra.mxu0 0.0
      %1688 = vmatprep.subr.mxu0 0.0
      %1689 = vmatpush2.msra.mxu0 0.0
      %1690 = vmatprep.subr.mxu0 0.0
      %1691 = vmatpush2.msra.mxu0 0.0
      %1692 = vmatprep.subr.mxu0 0.0
      %1693 = vmatpush2.msra.mxu0 0.0
      %1694 = vmatprep.subr.mxu0 0.0
      %1695 = vmatpush2.msra.mxu0 0.0
      %1696 = vmatprep.mubr.f32.mxu0 0.0
      %1697 = vmatmul.mubr.f32.gmra.mxu0 %v1624
      %v1698 = vpop.f32.mrf.mxu0
      %v1699 = vadd.f32 0.0, %v1698
      %v1700 = vpop.f32.mrf.mxu0
      %v1701 = vadd.f32 0.0, %v1700
      %1702 = vdwg.mxu0
      %v1703 = vadd.f32 %v175, %v1699
      %v1704 = vadd.f32 %v175, %v1701
      %v1705 = vld [vmem:[%s272] sm:$0xff]
      %v1706 = vld [vmem:[%s1513] sm:$0xff]
      %v1707 = vld [vmem:[%s1513 + $0x8] sm:$0xff]
      %v1708 = vld [vmem:[%s1513 + $0x10] sm:$0xff]
      %v1709 = vld [vmem:[%s1513 + $0x18] sm:$0xff]
      %v1710 = vld [vmem:[%s1513 + $0x20] sm:$0xff]
      %v1711 = vld [vmem:[%s1513 + $0x28] sm:$0xff]
      %v1712 = vld [vmem:[%s1513 + $0x30] sm:$0xff]
      %v1713 = vld [vmem:[%s1513 + $0x38] sm:$0xff]
      %v1714 = vld [vmem:[%s1513 + $0x40] sm:$0xf]
      %v1715 = vld [vmem:[%s1513 + $0x48] sm:$0xf]
      %v1717 = vsel %vm188, %v1705, 0
      %v1720 = vsel %vm192, %v1714, 0
      %v1723 = vsel %vm192, %v1715, 0
      %1725 = vmatprep.subr.mxu0 0.0
      %1726 = vmatpush1.msra.mxu0 0.0
      %1727 = vmatprep.subr.mxu0 0.0
      %1728 = vmatpush1.msra.mxu0 0.0
      %1729 = vmatprep.subr.mxu0 0.0
      %1730 = vmatpush1.msra.mxu0 0.0
      %1731 = vmatprep.subr.mxu0 0.0
      %1732 = vmatpush1.msra.mxu0 0.0
      %1733 = vmatprep.subr.mxu0 0.0
      %1734 = vmatpush1.msra.mxu0 0.0
      %1735 = vmatprep.subr.mxu0 0.0
      %1736 = vmatpush1.msra.mxu0 0.0
      %1737 = vmatprep.subr.mxu0 0.0
      %1738 = vmatpush1.msra.mxu0 0.0
      %1739 = vmatprep.subr.mxu0 0.0
      %1740 = vmatpush1.msra.mxu0 0.0
      %1741 = vmatprep.subr.mxu0 0.0
      %1742 = vmatpush1.msra.mxu0 0.0
      %1743 = vmatprep.subr.mxu0 0.0
      %1744 = vmatpush1.msra.mxu0 0.0
      %1745 = vmatprep.subr.mxu0 0.0
      %1746 = vmatpush1.msra.mxu0 0.0
      %1747 = vmatprep.subr.mxu0 %v1723
      %1748 = vmatpush1.msra.mxu0 %v1720
      %1749 = vmatprep.subr.mxu0 %v1713
      %1750 = vmatpush1.msra.mxu0 %v1712
      %1751 = vmatprep.subr.mxu0 %v1711
      %1752 = vmatpush1.msra.mxu0 %v1710
      %1753 = vmatprep.subr.mxu0 %v1709
      %1754 = vmatpush1.msra.mxu0 %v1708
      %1755 = vmatprep.subr.mxu0 %v1707
      %1756 = vmatpush1.msra.mxu0 %v1706
      %1757 = vmatprep.subr.mxu0 0.0
      %1758 = vmatpush2.msra.mxu0 0.0
      %1759 = vmatprep.subr.mxu0 0.0
      %1760 = vmatpush2.msra.mxu0 0.0
      %1761 = vmatprep.subr.mxu0 0.0
      %1762 = vmatpush2.msra.mxu0 0.0
      %1763 = vmatprep.subr.mxu0 0.0
      %1764 = vmatpush2.msra.mxu0 0.0
      %1765 = vmatprep.subr.mxu0 0.0
      %1766 = vmatpush2.msra.mxu0 0.0
      %1767 = vmatprep.subr.mxu0 0.0
      %1768 = vmatpush2.msra.mxu0 0.0
      %1769 = vmatprep.subr.mxu0 0.0
      %1770 = vmatpush2.msra.mxu0 0.0
      %1771 = vmatprep.subr.mxu0 0.0
      %1772 = vmatpush2.msra.mxu0 0.0
      %1773 = vmatprep.subr.mxu0 0.0
      %1774 = vmatpush2.msra.mxu0 0.0
      %1775 = vmatprep.subr.mxu0 0.0
      %1776 = vmatpush2.msra.mxu0 0.0
      %1777 = vmatprep.subr.mxu0 0.0
      %1778 = vmatpush2.msra.mxu0 0.0
      %1779 = vmatprep.subr.mxu0 0.0
      %1780 = vmatpush2.msra.mxu0 0.0
      %1781 = vmatprep.subr.mxu0 0.0
      %1782 = vmatpush2.msra.mxu0 0.0
      %1783 = vmatprep.subr.mxu0 0.0
      %1784 = vmatpush2.msra.mxu0 0.0
      %1785 = vmatprep.subr.mxu0 0.0
      %1786 = vmatpush2.msra.mxu0 0.0
      %1787 = vmatprep.subr.mxu0 0.0
      %1788 = vmatpush2.msra.mxu0 0.0
      %1789 = vmatprep.mubr.f32.mxu0 0.0
      %1790 = vmatmul.mubr.f32.gmra.mxu0 %v1717
      %v1791 = vpop.f32.mrf.mxu0
      %v1792 = vadd.f32 0.0, %v1791
      %v1793 = vpop.f32.mrf.mxu0
      %v1794 = vadd.f32 0.0, %v1793
      %1795 = vdwg.mxu0
      %v1796 = vadd.f32 %v1703, %v1792
      %v1797 = vadd.f32 %v1704, %v1794
      %v1798 = vld [vmem:[%s367] sm:$0xff]
      %s1799 = scalar_lea.vmem %s165, 560
      %v1800 = vld [vmem:[%s1799] sm:$0xff]
      %v1801 = vld [vmem:[%s1799 + $0x8] sm:$0xff]
      %v1802 = vld [vmem:[%s1799 + $0x10] sm:$0xff]
      %v1803 = vld [vmem:[%s1799 + $0x18] sm:$0xff]
      %v1804 = vld [vmem:[%s1799 + $0x20] sm:$0xff]
      %v1805 = vld [vmem:[%s1799 + $0x28] sm:$0xff]
      %v1806 = vld [vmem:[%s1799 + $0x30] sm:$0xff]
      %v1807 = vld [vmem:[%s1799 + $0x38] sm:$0xff]
      %v1808 = vld [vmem:[%s1799 + $0x40] sm:$0xf]
      %v1809 = vld [vmem:[%s1799 + $0x48] sm:$0xf]
      %v1811 = vsel %vm188, %v1798, 0
      %v1814 = vsel %vm192, %v1808, 0
      %v1817 = vsel %vm192, %v1809, 0
      %1819 = vmatprep.subr.mxu0 0.0
      %1820 = vmatpush1.msra.mxu0 0.0
      %1821 = vmatprep.subr.mxu0 0.0
      %1822 = vmatpush1.msra.mxu0 0.0
      %1823 = vmatprep.subr.mxu0 0.0
      %1824 = vmatpush1.msra.mxu0 0.0
      %1825 = vmatprep.subr.mxu0 0.0
      %1826 = vmatpush1.msra.mxu0 0.0
      %1827 = vmatprep.subr.mxu0 0.0
      %1828 = vmatpush1.msra.mxu0 0.0
      %1829 = vmatprep.subr.mxu0 0.0
      %1830 = vmatpush1.msra.mxu0 0.0
      %1831 = vmatprep.subr.mxu0 0.0
      %1832 = vmatpush1.msra.mxu0 0.0
      %1833 = vmatprep.subr.mxu0 0.0
      %1834 = vmatpush1.msra.mxu0 0.0
      %1835 = vmatprep.subr.mxu0 0.0
      %1836 = vmatpush1.msra.mxu0 0.0
      %1837 = vmatprep.subr.mxu0 0.0
      %1838 = vmatpush1.msra.mxu0 0.0
      %1839 = vmatprep.subr.mxu0 0.0
      %1840 = vmatpush1.msra.mxu0 0.0
      %1841 = vmatprep.subr.mxu0 %v1817
      %1842 = vmatpush1.msra.mxu0 %v1814
      %1843 = vmatprep.subr.mxu0 %v1807
      %1844 = vmatpush1.msra.mxu0 %v1806
      %1845 = vmatprep.subr.mxu0 %v1805
      %1846 = vmatpush1.msra.mxu0 %v1804
      %1847 = vmatprep.subr.mxu0 %v1803
      %1848 = vmatpush1.msra.mxu0 %v1802
      %1849 = vmatprep.subr.mxu0 %v1801
      %1850 = vmatpush1.msra.mxu0 %v1800
      %1851 = vmatprep.subr.mxu0 0.0
      %1852 = vmatpush2.msra.mxu0 0.0
      %1853 = vmatprep.subr.mxu0 0.0
      %1854 = vmatpush2.msra.mxu0 0.0
      %1855 = vmatprep.subr.mxu0 0.0
      %1856 = vmatpush2.msra.mxu0 0.0
      %1857 = vmatprep.subr.mxu0 0.0
      %1858 = vmatpush2.msra.mxu0 0.0
      %1859 = vmatprep.subr.mxu0 0.0
      %1860 = vmatpush2.msra.mxu0 0.0
      %1861 = vmatprep.subr.mxu0 0.0
      %1862 = vmatpush2.msra.mxu0 0.0
      %1863 = vmatprep.subr.mxu0 0.0
      %1864 = vmatpush2.msra.mxu0 0.0
      %1865 = vmatprep.subr.mxu0 0.0
      %1866 = vmatpush2.msra.mxu0 0.0
      %1867 = vmatprep.subr.mxu0 0.0
      %1868 = vmatpush2.msra.mxu0 0.0
      %1869 = vmatprep.subr.mxu0 0.0
      %1870 = vmatpush2.msra.mxu0 0.0
      %1871 = vmatprep.subr.mxu0 0.0
      %1872 = vmatpush2.msra.mxu0 0.0
      %1873 = vmatprep.subr.mxu0 0.0
      %1874 = vmatpush2.msra.mxu0 0.0
      %1875 = vmatprep.subr.mxu0 0.0
      %1876 = vmatpush2.msra.mxu0 0.0
      %1877 = vmatprep.subr.mxu0 0.0
      %1878 = vmatpush2.msra.mxu0 0.0
      %1879 = vmatprep.subr.mxu0 0.0
      %1880 = vmatpush2.msra.mxu0 0.0
      %1881 = vmatprep.subr.mxu0 0.0
      %1882 = vmatpush2.msra.mxu0 0.0
      %1883 = vmatprep.mubr.f32.mxu0 0.0
      %1884 = vmatmul.mubr.f32.gmra.mxu0 %v1811
      %v1885 = vpop.f32.mrf.mxu0
      %v1886 = vadd.f32 0.0, %v1885
      %v1887 = vpop.f32.mrf.mxu0
      %v1888 = vadd.f32 0.0, %v1887
      %1889 = vdwg.mxu0
      %v1890 = vadd.f32 %v1796, %v1886
      %v1891 = vadd.f32 %v1797, %v1888
      %v1892 = vmax.f32 %v1890, 0.0
      %v1893 = vmax.f32 %v1891, 0.0
      %v1894 = vmin.f32 %v1892, 6.0
      %v1895 = vmin.f32 %v1893, 6.0
      %1896 = vst [vmem:[%s170 + $0x50] sm:$0xff] %v1894
      %1897 = vst [vmem:[%s170 + $0x58] sm:$0xff] %v1895
      %v1898 = vld [vmem:[%s1] sm:$0xff]
      %v1899 = vld [vmem:[%s1513] sm:$0xff]
      %v1900 = vld [vmem:[%s1513 + $0x8] sm:$0xff]
      %v1901 = vld [vmem:[%s1513 + $0x10] sm:$0xff]
      %v1902 = vld [vmem:[%s1513 + $0x18] sm:$0xff]
      %v1903 = vld [vmem:[%s1513 + $0x20] sm:$0xff]
      %v1904 = vld [vmem:[%s1513 + $0x28] sm:$0xff]
      %v1905 = vld [vmem:[%s1513 + $0x30] sm:$0xff]
      %v1906 = vld [vmem:[%s1513 + $0x38] sm:$0xff]
      %v1907 = vld [vmem:[%s1513 + $0x40] sm:$0xf]
      %v1908 = vld [vmem:[%s1513 + $0x48] sm:$0xf]
      %v1910 = vsel %vm188, %v1898, 0
      %v1913 = vsel %vm192, %v1907, 0
      %v1916 = vsel %vm192, %v1908, 0
      %1918 = vmatprep.subr.mxu0 0.0
      %1919 = vmatpush1.msra.mxu0 0.0
      %1920 = vmatprep.subr.mxu0 0.0
      %1921 = vmatpush1.msra.mxu0 0.0
      %1922 = vmatprep.subr.mxu0 0.0
      %1923 = vmatpush1.msra.mxu0 0.0
      %1924 = vmatprep.subr.mxu0 0.0
      %1925 = vmatpush1.msra.mxu0 0.0
      %1926 = vmatprep.subr.mxu0 0.0
      %1927 = vmatpush1.msra.mxu0 0.0
      %1928 = vmatprep.subr.mxu0 0.0
      %1929 = vmatpush1.msra.mxu0 0.0
      %1930 = vmatprep.subr.mxu0 0.0
      %1931 = vmatpush1.msra.mxu0 0.0
      %1932 = vmatprep.subr.mxu0 0.0
      %1933 = vmatpush1.msra.mxu0 0.0
      %1934 = vmatprep.subr.mxu0 0.0
      %1935 = vmatpush1.msra.mxu0 0.0
      %1936 = vmatprep.subr.mxu0 0.0
      %1937 = vmatpush1.msra.mxu0 0.0
      %1938 = vmatprep.subr.mxu0 0.0
      %1939 = vmatpush1.msra.mxu0 0.0
      %1940 = vmatprep.subr.mxu0 %v1916
      %1941 = vmatpush1.msra.mxu0 %v1913
      %1942 = vmatprep.subr.mxu0 %v1906
      %1943 = vmatpush1.msra.mxu0 %v1905
      %1944 = vmatprep.subr.mxu0 %v1904
      %1945 = vmatpush1.msra.mxu0 %v1903
      %1946 = vmatprep.subr.mxu0 %v1902
      %1947 = vmatpush1.msra.mxu0 %v1901
      %1948 = vmatprep.subr.mxu0 %v1900
      %1949 = vmatpush1.msra.mxu0 %v1899
      %1950 = vmatprep.subr.mxu0 0.0
      %1951 = vmatpush2.msra.mxu0 0.0
      %1952 = vmatprep.subr.mxu0 0.0
      %1953 = vmatpush2.msra.mxu0 0.0
      %1954 = vmatprep.subr.mxu0 0.0
      %1955 = vmatpush2.msra.mxu0 0.0
      %1956 = vmatprep.subr.mxu0 0.0
      %1957 = vmatpush2.msra.mxu0 0.0
      %1958 = vmatprep.subr.mxu0 0.0
      %1959 = vmatpush2.msra.mxu0 0.0
      %1960 = vmatprep.subr.mxu0 0.0
      %1961 = vmatpush2.msra.mxu0 0.0
      %1962 = vmatprep.subr.mxu0 0.0
      %1963 = vmatpush2.msra.mxu0 0.0
      %1964 = vmatprep.subr.mxu0 0.0
      %1965 = vmatpush2.msra.mxu0 0.0
      %1966 = vmatprep.subr.mxu0 0.0
      %1967 = vmatpush2.msra.mxu0 0.0
      %1968 = vmatprep.subr.mxu0 0.0
      %1969 = vmatpush2.msra.mxu0 0.0
      %1970 = vmatprep.subr.mxu0 0.0
      %1971 = vmatpush2.msra.mxu0 0.0
      %1972 = vmatprep.subr.mxu0 0.0
      %1973 = vmatpush2.msra.mxu0 0.0
      %1974 = vmatprep.subr.mxu0 0.0
      %1975 = vmatpush2.msra.mxu0 0.0
      %1976 = vmatprep.subr.mxu0 0.0
      %1977 = vmatpush2.msra.mxu0 0.0
      %1978 = vmatprep.subr.mxu0 0.0
      %1979 = vmatpush2.msra.mxu0 0.0
      %1980 = vmatprep.subr.mxu0 0.0
      %1981 = vmatpush2.msra.mxu0 0.0
      %1982 = vmatprep.mubr.f32.mxu0 0.0
      %1983 = vmatmul.mubr.f32.gmra.mxu0 %v1910
      %v1984 = vpop.f32.mrf.mxu0
      %v1985 = vadd.f32 0.0, %v1984
      %v1986 = vpop.f32.mrf.mxu0
      %v1987 = vadd.f32 0.0, %v1986
      %1988 = vdwg.mxu0
      %v1989 = vadd.f32 %v175, %v1985
      %v1990 = vadd.f32 %v175, %v1987
      %v1991 = vld [vmem:[%s272] sm:$0xff]
      %v1992 = vld [vmem:[%s1799] sm:$0xff]
      %v1993 = vld [vmem:[%s1799 + $0x8] sm:$0xff]
      %v1994 = vld [vmem:[%s1799 + $0x10] sm:$0xff]
      %v1995 = vld [vmem:[%s1799 + $0x18] sm:$0xff]
      %v1996 = vld [vmem:[%s1799 + $0x20] sm:$0xff]
      %v1997 = vld [vmem:[%s1799 + $0x28] sm:$0xff]
      %v1998 = vld [vmem:[%s1799 + $0x30] sm:$0xff]
      %v1999 = vld [vmem:[%s1799 + $0x38] sm:$0xff]
      %v2000 = vld [vmem:[%s1799 + $0x40] sm:$0xf]
      %v2001 = vld [vmem:[%s1799 + $0x48] sm:$0xf]
      %v2003 = vsel %vm188, %v1991, 0
      %v2006 = vsel %vm192, %v2000, 0
      %v2009 = vsel %vm192, %v2001, 0
      %2011 = vmatprep.subr.mxu0 0.0
      %2012 = vmatpush1.msra.mxu0 0.0
      %2013 = vmatprep.subr.mxu0 0.0
      %2014 = vmatpush1.msra.mxu0 0.0
      %2015 = vmatprep.subr.mxu0 0.0
      %2016 = vmatpush1.msra.mxu0 0.0
      %2017 = vmatprep.subr.mxu0 0.0
      %2018 = vmatpush1.msra.mxu0 0.0
      %2019 = vmatprep.subr.mxu0 0.0
      %2020 = vmatpush1.msra.mxu0 0.0
      %2021 = vmatprep.subr.mxu0 0.0
      %2022 = vmatpush1.msra.mxu0 0.0
      %2023 = vmatprep.subr.mxu0 0.0
      %2024 = vmatpush1.msra.mxu0 0.0
      %2025 = vmatprep.subr.mxu0 0.0
      %2026 = vmatpush1.msra.mxu0 0.0
      %2027 = vmatprep.subr.mxu0 0.0
      %2028 = vmatpush1.msra.mxu0 0.0
      %2029 = vmatprep.subr.mxu0 0.0
      %2030 = vmatpush1.msra.mxu0 0.0
      %2031 = vmatprep.subr.mxu0 0.0
      %2032 = vmatpush1.msra.mxu0 0.0
      %2033 = vmatprep.subr.mxu0 %v2009
      %2034 = vmatpush1.msra.mxu0 %v2006
      %2035 = vmatprep.subr.mxu0 %v1999
      %2036 = vmatpush1.msra.mxu0 %v1998
      %2037 = vmatprep.subr.mxu0 %v1997
      %2038 = vmatpush1.msra.mxu0 %v1996
      %2039 = vmatprep.subr.mxu0 %v1995
      %2040 = vmatpush1.msra.mxu0 %v1994
      %2041 = vmatprep.subr.mxu0 %v1993
      %2042 = vmatpush1.msra.mxu0 %v1992
      %2043 = vmatprep.subr.mxu0 0.0
      %2044 = vmatpush2.msra.mxu0 0.0
      %2045 = vmatprep.subr.mxu0 0.0
      %2046 = vmatpush2.msra.mxu0 0.0
      %2047 = vmatprep.subr.mxu0 0.0
      %2048 = vmatpush2.msra.mxu0 0.0
      %2049 = vmatprep.subr.mxu0 0.0
      %2050 = vmatpush2.msra.mxu0 0.0
      %2051 = vmatprep.subr.mxu0 0.0
      %2052 = vmatpush2.msra.mxu0 0.0
      %2053 = vmatprep.subr.mxu0 0.0
      %2054 = vmatpush2.msra.mxu0 0.0
      %2055 = vmatprep.subr.mxu0 0.0
      %2056 = vmatpush2.msra.mxu0 0.0
      %2057 = vmatprep.subr.mxu0 0.0
      %2058 = vmatpush2.msra.mxu0 0.0
      %2059 = vmatprep.subr.mxu0 0.0
      %2060 = vmatpush2.msra.mxu0 0.0
      %2061 = vmatprep.subr.mxu0 0.0
      %2062 = vmatpush2.msra.mxu0 0.0
      %2063 = vmatprep.subr.mxu0 0.0
      %2064 = vmatpush2.msra.mxu0 0.0
      %2065 = vmatprep.subr.mxu0 0.0
      %2066 = vmatpush2.msra.mxu0 0.0
      %2067 = vmatprep.subr.mxu0 0.0
      %2068 = vmatpush2.msra.mxu0 0.0
      %2069 = vmatprep.subr.mxu0 0.0
      %2070 = vmatpush2.msra.mxu0 0.0
      %2071 = vmatprep.subr.mxu0 0.0
      %2072 = vmatpush2.msra.mxu0 0.0
      %2073 = vmatprep.subr.mxu0 0.0
      %2074 = vmatpush2.msra.mxu0 0.0
      %2075 = vmatprep.mubr.f32.mxu0 0.0
      %2076 = vmatmul.mubr.f32.gmra.mxu0 %v2003
      %v2077 = vpop.f32.mrf.mxu0
      %v2078 = vadd.f32 0.0, %v2077
      %v2079 = vpop.f32.mrf.mxu0
      %v2080 = vadd.f32 0.0, %v2079
      %2081 = vdwg.mxu0
      %v2082 = vadd.f32 %v1989, %v2078
      %v2083 = vadd.f32 %v1990, %v2080
      %v2084 = vld [vmem:[%s367] sm:$0xff]
      %s2085 = scalar_lea.vmem %s165, 640
      %v2086 = vld [vmem:[%s2085] sm:$0xff]
      %v2087 = vld [vmem:[%s2085 + $0x8] sm:$0xff]
      %v2088 = vld [vmem:[%s2085 + $0x10] sm:$0xff]
      %v2089 = vld [vmem:[%s2085 + $0x18] sm:$0xff]
      %v2090 = vld [vmem:[%s2085 + $0x20] sm:$0xff]
      %v2091 = vld [vmem:[%s2085 + $0x28] sm:$0xff]
      %v2092 = vld [vmem:[%s2085 + $0x30] sm:$0xff]
      %v2093 = vld [vmem:[%s2085 + $0x38] sm:$0xff]
      %v2094 = vld [vmem:[%s2085 + $0x40] sm:$0xf]
      %v2095 = vld [vmem:[%s2085 + $0x48] sm:$0xf]
      %v2097 = vsel %vm188, %v2084, 0
      %v2100 = vsel %vm192, %v2094, 0
      %v2103 = vsel %vm192, %v2095, 0
      %2105 = vmatprep.subr.mxu0 0.0
      %2106 = vmatpush1.msra.mxu0 0.0
      %2107 = vmatprep.subr.mxu0 0.0
      %2108 = vmatpush1.msra.mxu0 0.0
      %2109 = vmatprep.subr.mxu0 0.0
      %2110 = vmatpush1.msra.mxu0 0.0
      %2111 = vmatprep.subr.mxu0 0.0
      %2112 = vmatpush1.msra.mxu0 0.0
      %2113 = vmatprep.subr.mxu0 0.0
      %2114 = vmatpush1.msra.mxu0 0.0
      %2115 = vmatprep.subr.mxu0 0.0
      %2116 = vmatpush1.msra.mxu0 0.0
      %2117 = vmatprep.subr.mxu0 0.0
      %2118 = vmatpush1.msra.mxu0 0.0
      %2119 = vmatprep.subr.mxu0 0.0
      %2120 = vmatpush1.msra.mxu0 0.0
      %2121 = vmatprep.subr.mxu0 0.0
      %2122 = vmatpush1.msra.mxu0 0.0
      %2123 = vmatprep.subr.mxu0 0.0
      %2124 = vmatpush1.msra.mxu0 0.0
      %2125 = vmatprep.subr.mxu0 0.0
      %2126 = vmatpush1.msra.mxu0 0.0
      %2127 = vmatprep.subr.mxu0 %v2103
      %2128 = vmatpush1.msra.mxu0 %v2100
      %2129 = vmatprep.subr.mxu0 %v2093
      %2130 = vmatpush1.msra.mxu0 %v2092
      %2131 = vmatprep.subr.mxu0 %v2091
      %2132 = vmatpush1.msra.mxu0 %v2090
      %2133 = vmatprep.subr.mxu0 %v2089
      %2134 = vmatpush1.msra.mxu0 %v2088
      %2135 = vmatprep.subr.mxu0 %v2087
      %2136 = vmatpush1.msra.mxu0 %v2086
      %2137 = vmatprep.subr.mxu0 0.0
      %2138 = vmatpush2.msra.mxu0 0.0
      %2139 = vmatprep.subr.mxu0 0.0
      %2140 = vmatpush2.msra.mxu0 0.0
      %2141 = vmatprep.subr.mxu0 0.0
      %2142 = vmatpush2.msra.mxu0 0.0
      %2143 = vmatprep.subr.mxu0 0.0
      %2144 = vmatpush2.msra.mxu0 0.0
      %2145 = vmatprep.subr.mxu0 0.0
      %2146 = vmatpush2.msra.mxu0 0.0
      %2147 = vmatprep.subr.mxu0 0.0
      %2148 = vmatpush2.msra.mxu0 0.0
      %2149 = vmatprep.subr.mxu0 0.0
      %2150 = vmatpush2.msra.mxu0 0.0
      %2151 = vmatprep.subr.mxu0 0.0
      %2152 = vmatpush2.msra.mxu0 0.0
      %2153 = vmatprep.subr.mxu0 0.0
      %2154 = vmatpush2.msra.mxu0 0.0
      %2155 = vmatprep.subr.mxu0 0.0
      %2156 = vmatpush2.msra.mxu0 0.0
      %2157 = vmatprep.subr.mxu0 0.0
      %2158 = vmatpush2.msra.mxu0 0.0
      %2159 = vmatprep.subr.mxu0 0.0
      %2160 = vmatpush2.msra.mxu0 0.0
      %2161 = vmatprep.subr.mxu0 0.0
      %2162 = vmatpush2.msra.mxu0 0.0
      %2163 = vmatprep.subr.mxu0 0.0
      %2164 = vmatpush2.msra.mxu0 0.0
      %2165 = vmatprep.subr.mxu0 0.0
      %2166 = vmatpush2.msra.mxu0 0.0
      %2167 = vmatprep.subr.mxu0 0.0
      %2168 = vmatpush2.msra.mxu0 0.0
      %2169 = vmatprep.mubr.f32.mxu0 0.0
      %2170 = vmatmul.mubr.f32.gmra.mxu0 %v2097
      %v2171 = vpop.f32.mrf.mxu0
      %v2172 = vadd.f32 0.0, %v2171
      %v2173 = vpop.f32.mrf.mxu0
      %v2174 = vadd.f32 0.0, %v2173
      %2175 = vdwg.mxu0
      %v2176 = vadd.f32 %v2082, %v2172
      %v2177 = vadd.f32 %v2083, %v2174
      %v2178 = vmax.f32 %v2176, 0.0
      %v2179 = vmax.f32 %v2177, 0.0
      %v2180 = vmin.f32 %v2178, 6.0
      %v2181 = vmin.f32 %v2179, 6.0
      %2182 = vst [vmem:[%s170 + $0x60] sm:$0xff] %v2180
      %2183 = vst [vmem:[%s170 + $0x68] sm:$0xff] %v2181
      %v2184 = vld [vmem:[%s1] sm:$0xff]
      %v2185 = vld [vmem:[%s1799] sm:$0xff]
      %v2186 = vld [vmem:[%s1799 + $0x8] sm:$0xff]
      %v2187 = vld [vmem:[%s1799 + $0x10] sm:$0xff]
      %v2188 = vld [vmem:[%s1799 + $0x18] sm:$0xff]
      %v2189 = vld [vmem:[%s1799 + $0x20] sm:$0xff]
      %v2190 = vld [vmem:[%s1799 + $0x28] sm:$0xff]
      %v2191 = vld [vmem:[%s1799 + $0x30] sm:$0xff]
      %v2192 = vld [vmem:[%s1799 + $0x38] sm:$0xff]
      %v2193 = vld [vmem:[%s1799 + $0x40] sm:$0xf]
      %v2194 = vld [vmem:[%s1799 + $0x48] sm:$0xf]
      %v2196 = vsel %vm188, %v2184, 0
      %v2199 = vsel %vm192, %v2193, 0
      %v2202 = vsel %vm192, %v2194, 0
      %2204 = vmatprep.subr.mxu0 0.0
      %2205 = vmatpush1.msra.mxu0 0.0
      %2206 = vmatprep.subr.mxu0 0.0
      %2207 = vmatpush1.msra.mxu0 0.0
      %2208 = vmatprep.subr.mxu0 0.0
      %2209 = vmatpush1.msra.mxu0 0.0
      %2210 = vmatprep.subr.mxu0 0.0
      %2211 = vmatpush1.msra.mxu0 0.0
      %2212 = vmatprep.subr.mxu0 0.0
      %2213 = vmatpush1.msra.mxu0 0.0
      %2214 = vmatprep.subr.mxu0 0.0
      %2215 = vmatpush1.msra.mxu0 0.0
      %2216 = vmatprep.subr.mxu0 0.0
      %2217 = vmatpush1.msra.mxu0 0.0
      %2218 = vmatprep.subr.mxu0 0.0
      %2219 = vmatpush1.msra.mxu0 0.0
      %2220 = vmatprep.subr.mxu0 0.0
      %2221 = vmatpush1.msra.mxu0 0.0
      %2222 = vmatprep.subr.mxu0 0.0
      %2223 = vmatpush1.msra.mxu0 0.0
      %2224 = vmatprep.subr.mxu0 0.0
      %2225 = vmatpush1.msra.mxu0 0.0
      %2226 = vmatprep.subr.mxu0 %v2202
      %2227 = vmatpush1.msra.mxu0 %v2199
      %2228 = vmatprep.subr.mxu0 %v2192
      %2229 = vmatpush1.msra.mxu0 %v2191
      %2230 = vmatprep.subr.mxu0 %v2190
      %2231 = vmatpush1.msra.mxu0 %v2189
      %2232 = vmatprep.subr.mxu0 %v2188
      %2233 = vmatpush1.msra.mxu0 %v2187
      %2234 = vmatprep.subr.mxu0 %v2186
      %2235 = vmatpush1.msra.mxu0 %v2185
      %2236 = vmatprep.subr.mxu0 0.0
      %2237 = vmatpush2.msra.mxu0 0.0
      %2238 = vmatprep.subr.mxu0 0.0
      %2239 = vmatpush2.msra.mxu0 0.0
      %2240 = vmatprep.subr.mxu0 0.0
      %2241 = vmatpush2.msra.mxu0 0.0
      %2242 = vmatprep.subr.mxu0 0.0
      %2243 = vmatpush2.msra.mxu0 0.0
      %2244 = vmatprep.subr.mxu0 0.0
      %2245 = vmatpush2.msra.mxu0 0.0
      %2246 = vmatprep.subr.mxu0 0.0
      %2247 = vmatpush2.msra.mxu0 0.0
      %2248 = vmatprep.subr.mxu0 0.0
      %2249 = vmatpush2.msra.mxu0 0.0
      %2250 = vmatprep.subr.mxu0 0.0
      %2251 = vmatpush2.msra.mxu0 0.0
      %2252 = vmatprep.subr.mxu0 0.0
      %2253 = vmatpush2.msra.mxu0 0.0
      %2254 = vmatprep.subr.mxu0 0.0
      %2255 = vmatpush2.msra.mxu0 0.0
      %2256 = vmatprep.subr.mxu0 0.0
      %2257 = vmatpush2.msra.mxu0 0.0
      %2258 = vmatprep.subr.mxu0 0.0
      %2259 = vmatpush2.msra.mxu0 0.0
      %2260 = vmatprep.subr.mxu0 0.0
      %2261 = vmatpush2.msra.mxu0 0.0
      %2262 = vmatprep.subr.mxu0 0.0
      %2263 = vmatpush2.msra.mxu0 0.0
      %2264 = vmatprep.subr.mxu0 0.0
      %2265 = vmatpush2.msra.mxu0 0.0
      %2266 = vmatprep.subr.mxu0 0.0
      %2267 = vmatpush2.msra.mxu0 0.0
      %2268 = vmatprep.mubr.f32.mxu0 0.0
      %2269 = vmatmul.mubr.f32.gmra.mxu0 %v2196
      %v2270 = vpop.f32.mrf.mxu0
      %v2271 = vadd.f32 0.0, %v2270
      %v2272 = vpop.f32.mrf.mxu0
      %v2273 = vadd.f32 0.0, %v2272
      %2274 = vdwg.mxu0
      %v2275 = vadd.f32 %v175, %v2271
      %v2276 = vadd.f32 %v175, %v2273
      %v2277 = vld [vmem:[%s272] sm:$0xff]
      %v2278 = vld [vmem:[%s2085] sm:$0xff]
      %v2279 = vld [vmem:[%s2085 + $0x8] sm:$0xff]
      %v2280 = vld [vmem:[%s2085 + $0x10] sm:$0xff]
      %v2281 = vld [vmem:[%s2085 + $0x18] sm:$0xff]
      %v2282 = vld [vmem:[%s2085 + $0x20] sm:$0xff]
      %v2283 = vld [vmem:[%s2085 + $0x28] sm:$0xff]
      %v2284 = vld [vmem:[%s2085 + $0x30] sm:$0xff]
      %v2285 = vld [vmem:[%s2085 + $0x38] sm:$0xff]
      %v2286 = vld [vmem:[%s2085 + $0x40] sm:$0xf]
      %v2287 = vld [vmem:[%s2085 + $0x48] sm:$0xf]
      %v2289 = vsel %vm188, %v2277, 0
      %v2292 = vsel %vm192, %v2286, 0
      %v2295 = vsel %vm192, %v2287, 0
      %2297 = vmatprep.subr.mxu0 0.0
      %2298 = vmatpush1.msra.mxu0 0.0
      %2299 = vmatprep.subr.mxu0 0.0
      %2300 = vmatpush1.msra.mxu0 0.0
      %2301 = vmatprep.subr.mxu0 0.0
      %2302 = vmatpush1.msra.mxu0 0.0
      %2303 = vmatprep.subr.mxu0 0.0
      %2304 = vmatpush1.msra.mxu0 0.0
      %2305 = vmatprep.subr.mxu0 0.0
      %2306 = vmatpush1.msra.mxu0 0.0
      %2307 = vmatprep.subr.mxu0 0.0
      %2308 = vmatpush1.msra.mxu0 0.0
      %2309 = vmatprep.subr.mxu0 0.0
      %2310 = vmatpush1.msra.mxu0 0.0
      %2311 = vmatprep.subr.mxu0 0.0
      %2312 = vmatpush1.msra.mxu0 0.0
      %2313 = vmatprep.subr.mxu0 0.0
      %2314 = vmatpush1.msra.mxu0 0.0
      %2315 = vmatprep.subr.mxu0 0.0
      %2316 = vmatpush1.msra.mxu0 0.0
      %2317 = vmatprep.subr.mxu0 0.0
      %2318 = vmatpush1.msra.mxu0 0.0
      %2319 = vmatprep.subr.mxu0 %v2295
      %2320 = vmatpush1.msra.mxu0 %v2292
      %2321 = vmatprep.subr.mxu0 %v2285
      %2322 = vmatpush1.msra.mxu0 %v2284
      %2323 = vmatprep.subr.mxu0 %v2283
      %2324 = vmatpush1.msra.mxu0 %v2282
      %2325 = vmatprep.subr.mxu0 %v2281
      %2326 = vmatpush1.msra.mxu0 %v2280
      %2327 = vmatprep.subr.mxu0 %v2279
      %2328 = vmatpush1.msra.mxu0 %v2278
      %2329 = vmatprep.subr.mxu0 0.0
      %2330 = vmatpush2.msra.mxu0 0.0
      %2331 = vmatprep.subr.mxu0 0.0
      %2332 = vmatpush2.msra.mxu0 0.0
      %2333 = vmatprep.subr.mxu0 0.0
      %2334 = vmatpush2.msra.mxu0 0.0
      %2335 = vmatprep.subr.mxu0 0.0
      %2336 = vmatpush2.msra.mxu0 0.0
      %2337 = vmatprep.subr.mxu0 0.0
      %2338 = vmatpush2.msra.mxu0 0.0
      %2339 = vmatprep.subr.mxu0 0.0
      %2340 = vmatpush2.msra.mxu0 0.0
      %2341 = vmatprep.subr.mxu0 0.0
      %2342 = vmatpush2.msra.mxu0 0.0
      %2343 = vmatprep.subr.mxu0 0.0
      %2344 = vmatpush2.msra.mxu0 0.0
      %2345 = vmatprep.subr.mxu0 0.0
      %2346 = vmatpush2.msra.mxu0 0.0
      %2347 = vmatprep.subr.mxu0 0.0
      %2348 = vmatpush2.msra.mxu0 0.0
      %2349 = vmatprep.subr.mxu0 0.0
      %2350 = vmatpush2.msra.mxu0 0.0
      %2351 = vmatprep.subr.mxu0 0.0
      %2352 = vmatpush2.msra.mxu0 0.0
      %2353 = vmatprep.subr.mxu0 0.0
      %2354 = vmatpush2.msra.mxu0 0.0
      %2355 = vmatprep.subr.mxu0 0.0
      %2356 = vmatpush2.msra.mxu0 0.0
      %2357 = vmatprep.subr.mxu0 0.0
      %2358 = vmatpush2.msra.mxu0 0.0
      %2359 = vmatprep.subr.mxu0 0.0
      %2360 = vmatpush2.msra.mxu0 0.0
      %2361 = vmatprep.mubr.f32.mxu0 0.0
      %2362 = vmatmul.mubr.f32.gmra.mxu0 %v2289
      %v2363 = vpop.f32.mrf.mxu0
      %v2364 = vadd.f32 0.0, %v2363
      %v2365 = vpop.f32.mrf.mxu0
      %v2366 = vadd.f32 0.0, %v2365
      %2367 = vdwg.mxu0
      %v2368 = vadd.f32 %v2275, %v2364
      %v2369 = vadd.f32 %v2276, %v2366
      %v2370 = vld [vmem:[%s367] sm:$0xff]
      %s2371 = scalar_lea.vmem %s165, 720
      %v2372 = vld [vmem:[%s2371] sm:$0xff]
      %v2373 = vld [vmem:[%s2371 + $0x8] sm:$0xff]
      %v2374 = vld [vmem:[%s2371 + $0x10] sm:$0xff]
      %v2375 = vld [vmem:[%s2371 + $0x18] sm:$0xff]
      %v2376 = vld [vmem:[%s2371 + $0x20] sm:$0xff]
      %v2377 = vld [vmem:[%s2371 + $0x28] sm:$0xff]
      %v2378 = vld [vmem:[%s2371 + $0x30] sm:$0xff]
      %v2379 = vld [vmem:[%s2371 + $0x38] sm:$0xff]
      %v2380 = vld [vmem:[%s2371 + $0x40] sm:$0xf]
      %v2381 = vld [vmem:[%s2371 + $0x48] sm:$0xf]
      %v2383 = vsel %vm188, %v2370, 0
      %v2386 = vsel %vm192, %v2380, 0
      %v2389 = vsel %vm192, %v2381, 0
      %2391 = vmatprep.subr.mxu0 0.0
      %2392 = vmatpush1.msra.mxu0 0.0
      %2393 = vmatprep.subr.mxu0 0.0
      %2394 = vmatpush1.msra.mxu0 0.0
      %2395 = vmatprep.subr.mxu0 0.0
      %2396 = vmatpush1.msra.mxu0 0.0
      %2397 = vmatprep.subr.mxu0 0.0
      %2398 = vmatpush1.msra.mxu0 0.0
      %2399 = vmatprep.subr.mxu0 0.0
      %2400 = vmatpush1.msra.mxu0 0.0
      %2401 = vmatprep.subr.mxu0 0.0
      %2402 = vmatpush1.msra.mxu0 0.0
      %2403 = vmatprep.subr.mxu0 0.0
      %2404 = vmatpush1.msra.mxu0 0.0
      %2405 = vmatprep.subr.mxu0 0.0
      %2406 = vmatpush1.msra.mxu0 0.0
      %2407 = vmatprep.subr.mxu0 0.0
      %2408 = vmatpush1.msra.mxu0 0.0
      %2409 = vmatprep.subr.mxu0 0.0
      %2410 = vmatpush1.msra.mxu0 0.0
      %2411 = vmatprep.subr.mxu0 0.0
      %2412 = vmatpush1.msra.mxu0 0.0
      %2413 = vmatprep.subr.mxu0 %v2389
      %2414 = vmatpush1.msra.mxu0 %v2386
      %2415 = vmatprep.subr.mxu0 %v2379
      %2416 = vmatpush1.msra.mxu0 %v2378
      %2417 = vmatprep.subr.mxu0 %v2377
      %2418 = vmatpush1.msra.mxu0 %v2376
      %2419 = vmatprep.subr.mxu0 %v2375
      %2420 = vmatpush1.msra.mxu0 %v2374
      %2421 = vmatprep.subr.mxu0 %v2373
      %2422 = vmatpush1.msra.mxu0 %v2372
      %2423 = vmatprep.subr.mxu0 0.0
      %2424 = vmatpush2.msra.mxu0 0.0
      %2425 = vmatprep.subr.mxu0 0.0
      %2426 = vmatpush2.msra.mxu0 0.0
      %2427 = vmatprep.subr.mxu0 0.0
      %2428 = vmatpush2.msra.mxu0 0.0
      %2429 = vmatprep.subr.mxu0 0.0
      %2430 = vmatpush2.msra.mxu0 0.0
      %2431 = vmatprep.subr.mxu0 0.0
      %2432 = vmatpush2.msra.mxu0 0.0
      %2433 = vmatprep.subr.mxu0 0.0
      %2434 = vmatpush2.msra.mxu0 0.0
      %2435 = vmatprep.subr.mxu0 0.0
      %2436 = vmatpush2.msra.mxu0 0.0
      %2437 = vmatprep.subr.mxu0 0.0
      %2438 = vmatpush2.msra.mxu0 0.0
      %2439 = vmatprep.subr.mxu0 0.0
      %2440 = vmatpush2.msra.mxu0 0.0
      %2441 = vmatprep.subr.mxu0 0.0
      %2442 = vmatpush2.msra.mxu0 0.0
      %2443 = vmatprep.subr.mxu0 0.0
      %2444 = vmatpush2.msra.mxu0 0.0
      %2445 = vmatprep.subr.mxu0 0.0
      %2446 = vmatpush2.msra.mxu0 0.0
      %2447 = vmatprep.subr.mxu0 0.0
      %2448 = vmatpush2.msra.mxu0 0.0
      %2449 = vmatprep.subr.mxu0 0.0
      %2450 = vmatpush2.msra.mxu0 0.0
      %2451 = vmatprep.subr.mxu0 0.0
      %2452 = vmatpush2.msra.mxu0 0.0
      %2453 = vmatprep.subr.mxu0 0.0
      %2454 = vmatpush2.msra.mxu0 0.0
      %2455 = vmatprep.mubr.f32.mxu0 0.0
      %2456 = vmatmul.mubr.f32.gmra.mxu0 %v2383
      %v2457 = vpop.f32.mrf.mxu0
      %v2458 = vadd.f32 0.0, %v2457
      %v2459 = vpop.f32.mrf.mxu0
      %v2460 = vadd.f32 0.0, %v2459
      %2461 = vdwg.mxu0
      %v2462 = vadd.f32 %v2368, %v2458
      %v2463 = vadd.f32 %v2369, %v2460
      %v2464 = vmax.f32 %v2462, 0.0
      %v2465 = vmax.f32 %v2463, 0.0
      %v2466 = vmin.f32 %v2464, 6.0
      %v2467 = vmin.f32 %v2465, 6.0
      %2468 = vst [vmem:[%s170 + $0x70] sm:$0xff] %v2466
      %2469 = vst [vmem:[%s170 + $0x78] sm:$0xff] %v2467
      %p2470 = scmp.lt.s32.totalorder %s14, 1
      %s2471 = scalar_select %p2470, %s14, 1
      %s2472 = smul.addr %s2471, 16
      %s2473 = smul.addr %s2472, 8
      %s2474 = scalar_lea.vmem %s3, %s2473
      // Predicated region
      $region33: #{conv3d_relu6.1} parent=31 // pred_check
        %p2475 = pneg %p100
      $region34: #{conv3d_relu6.1} parent=31 // pred_check_branch
        %2477 = sbr.rel (%p2475) target = $region36
      $region35: #{conv3d_relu6.1} parent=31 // pred_region
        _
      $region36: #{conv3d_relu6.1} parent=31 // pred_fallthru
        _
    $region32: #{conv3d_relu6.1} parent=5 // pred_fallthru
      _
    %p2478 = scmp.le.s32.totalorder 2, %s9
    // Predicated region
    $region37: #{conv3d_relu6.1} parent=5 // pred_check
      %p2479 = pneg %p2478
    $region38: #{conv3d_relu6.1} parent=5 // pred_check_branch
      %2481 = sbr.rel (%p2479) target = $region40
    $region39: #{conv3d_relu6.1} parent=5 // pred_region
      %s2482 = ssub.s32 %s9, 2
      // Predicated region
      $region41: #{conv3d_relu6.1} parent=39 // pred_check
        %p2483 = pneg %p106
      $region42: #{conv3d_relu6.1} parent=39 // pred_check_branch
        %2485 = sbr.rel (%p2483) target = $region44
      $region43: #{conv3d_relu6.1} parent=39 // pred_region
        %p2486 = scmp.lt.s32.totalorder %s15, 1
        %s2487 = scalar_select %p2486, %s15, 1
        %s2488 = smul.addr %s2487, 16
        %s2489 = smul.addr %s2488, 8
        %s2490 = scalar_lea.vmem %s3, %s2489
      $region44: #{conv3d_relu6.1} parent=39 // pred_fallthru
        _
    $region40: #{conv3d_relu6.1} parent=5 // pred_fallthru
      _
  $region6: #{conv3d_relu6.1} parent=0 // loop_footer
    %s13 = sadd.s32 1, %s9
  $region7: #{conv3d_relu6.1} parent=0 // loop_footer_branch
    %8 = sbr.rel target = $region3
  $region8: #{conv3d_relu6.1} parent=0 // loop_exit
    _

</llo_original>
